<compile_context>
chip_gen: v5e
topology: v5e:2x2
jax: 0.10.0
libtpu: 0.0.40
codegen_flags: <defaults>
</compile_context>

<pallas_src>
import jax
import jax.numpy as jnp
from jax.experimental import pallas as pl
from jax.experimental.pallas import tpu as pltpu


def _round_up(x, m):
    return (x + m - 1) // m * m


def _cdiv(a, b):
    return -(-a // b)


def a_decoder_kernel(z_ref, w1_ref, b1_ref, w2_ref, b2_ref, w3_ref, b3_ref, o_ref):
    # Layer 1: Linear(latent -> 384pad) + ReLU   (MXU bf16, f32 accumulate)
    h1 = jnp.dot(z_ref[...].astype(jnp.bfloat16), w1_ref[...],
                 preferred_element_type=jnp.float32)
    h1 = jnp.maximum(h1 + b1_ref[...], 0.0)

    # Layer 2: Linear(384pad -> 512pad) + ReLU
    h2 = jnp.dot(h1.astype(jnp.bfloat16), w2_ref[...],
                 preferred_element_type=jnp.float32)
    h2 = jnp.maximum(h2 + b2_ref[...], 0.0)

    # Layer 3: Linear(512pad -> 784) + Sigmoid (exp on the EUP)
    h3 = jnp.dot(h2.astype(jnp.bfloat16), w3_ref[...],
                 preferred_element_type=jnp.float32)
    o_ref[...] = jax.nn.sigmoid(h3 + b3_ref[...]).astype(o_ref.dtype)


def _choose_tiles(batch, tm_cap=512):
    """Pick (tm, n_tiles): near-balanced tiles (pad < 8 rows/tile), tiles capped
    at tm_cap rows, single tile only for small batches (<=128 rows) so v7x can
    shard >=2 tiles across its two TensorCores."""
    b8 = _round_up(batch, 8)
    n = max(1, _cdiv(b8, tm_cap))
    if n == 1 and b8 > 128:
        n = 2
    tm = _round_up(_cdiv(b8, n), 8)
    return tm, n


def a_decoder_forward(z, padded_params, *, tm_cap=512, out_dtype=jnp.bfloat16):
    """Fused decoder. z: [B, latent_dim] f32, padded_params from prepare_params."""
    w1, b1, w2, b2, w3, b3 = padded_params
    batch, latent = z.shape
    out_dim = w3.shape[1]  # 784 (unpadded; kernel writes it directly)

    tm, n_tiles = _choose_tiles(batch, tm_cap)
    b_pad = tm * n_tiles
    if b_pad != batch:
        z = jnp.pad(z, ((0, b_pad - batch), (0, 0)))

    batch_map = lambda i: (i, 0)
    resident_map = lambda i: (0, 0)  # same block every step -> weights stay in VMEM

    flops = 2 * b_pad * (w1.shape[0] * w1.shape[1]
                         + w2.shape[0] * w2.shape[1]
                         + w3.shape[0] * w3.shape[1])
    bytes_accessed = (z.size * 4
                      + sum(int(p.size) * p.dtype.itemsize for p in padded_params)
                      + b_pad * out_dim * jnp.dtype(out_dtype).itemsize)

    out = pl.pallas_call(
        a_decoder_kernel,
        out_shape=jax.ShapeDtypeStruct((b_pad, out_dim), out_dtype),
        grid=(n_tiles,),
        in_specs=[
            pl.BlockSpec((tm, latent), batch_map),
            pl.BlockSpec(w1.shape, resident_map),
            pl.BlockSpec(b1.shape, resident_map),
            pl.BlockSpec(w2.shape, resident_map),
            pl.BlockSpec(b2.shape, resident_map),
            pl.BlockSpec(w3.shape, resident_map),
            pl.BlockSpec(b3.shape, resident_map),
        ],
        out_specs=pl.BlockSpec((tm, out_dim), batch_map),
        compiler_params=pltpu.CompilerParams(
            dimension_semantics=("parallel",),   # shard batch tiles across v7x's 2 TCs
            vmem_limit_bytes=32 * 1024 * 1024,
        ),
        cost_estimate=pl.CostEstimate(
            flops=flops,
            transcendentals=b_pad * out_dim,     # sigmoid exp
            bytes_accessed=bytes_accessed,
        ),
    )(z, w1, b1, w2, b2, w3, b3)

    if b_pad != batch:
        out = out[:batch]                        # cheap row slice only when padded
    return out


def init_params(key, image_size=784, latent_dim=10, hidden_dim=500):
    """Deterministic f32 init mimicking nn.Linear's default U(-1/sqrt(fan_in), +)."""
    dims = [(latent_dim, 300), (300, hidden_dim), (hidden_dim, image_size)]
    params = []
    for fan_in, fan_out in dims:
        key, kw, kb = jax.random.split(key, 3)
        bound = float(fan_in) ** -0.5
        w = jax.random.uniform(kw, (fan_in, fan_out), jnp.float32, -bound, bound)
        b = jax.random.uniform(kb, (1, fan_out), jnp.float32, -bound, bound)
        params.extend([w, b])
    return tuple(params)


def prepare_params(params):
    """Zero-pad hidden dims to multiples of 128 (300->384, 500->512); weights bf16,
    biases f32.  The final output dim (784) is left unpadded so the kernel writes
    the real output shape directly."""
    w1, b1, w2, b2, w3, b3 = params

    d1 = _round_up(w1.shape[1], 128)  # 300 -> 384
    d2 = _round_up(w2.shape[1], 128)  # 500 -> 512

    w1p = jnp.pad(w1, ((0, 0), (0, d1 - w1.shape[1]))).astype(jnp.bfloat16)
    b1p = jnp.pad(b1, ((0, 0), (0, d1 - b1.shape[1])))
    w2p = jnp.pad(w2, ((0, d1 - w2.shape[0]), (0, d2 - w2.shape[1]))).astype(jnp.bfloat16)
    b2p = jnp.pad(b2, ((0, 0), (0, d2 - b2.shape[1])))
    w3p = jnp.pad(w3, ((0, d2 - w3.shape[0]), (0, 0))).astype(jnp.bfloat16)
    b3p = b3
    return (w1p, b1p, w2p, b2p, w3p, b3p)


def reference_forward(z, params):
    """Plain-JAX f32 reference for correctness checking."""
    w1, b1, w2, b2, w3, b3 = params
    h1 = jnp.maximum(z @ w1 + b1, 0.0)
    h2 = jnp.maximum(h1 @ w2 + b2, 0.0)
    return jax.nn.sigmoid(h2 @ w3 + b3)


if __name__ == "__main__":
    image_size, latent_dim, hidden_dim = 784, 10, 500
    batch = 8

    key = jax.random.PRNGKey(0)
    key, kz = jax.random.split(key)
    z = jax.random.normal(kz, (batch, latent_dim), jnp.float32)

    params_f32 = init_params(key, image_size=image_size,
                             latent_dim=latent_dim, hidden_dim=hidden_dim)
    params_kernel = prepare_params(params_f32)

    out = a_decoder_forward(z, params_kernel)
    out = jax.block_until_ready(out)

    ref = reference_forward(z, params_f32)
    assert out.shape == (batch, image_size), out.shape
    # bf16 weights + bf16 output -> looser tolerance vs. the f32 reference.
    max_err = float(jnp.max(jnp.abs(out.astype(jnp.float32) - ref)))
    assert max_err < 3e-2, f"mismatch vs reference, max abs err {max_err}"

    print("KERNEL_OK")
</pallas_src>

<mosaic_0001>
module attributes {stable_mosaic.version = 11 : i64} {
  func.func @a_decoder_kernel(%arg0: i32, %arg1: memref<8x10xf32, #tpu.memory_space<vmem>>, %arg2: memref<10x384xbf16, #tpu.memory_space<vmem>>, %arg3: memref<1x384xf32, #tpu.memory_space<vmem>>, %arg4: memref<384x512xbf16, #tpu.memory_space<vmem>>, %arg5: memref<1x512xf32, #tpu.memory_space<vmem>>, %arg6: memref<512x784xbf16, #tpu.memory_space<vmem>>, %arg7: memref<1x784xf32, #tpu.memory_space<vmem>>, %arg8: memref<8x784xbf16, #tpu.memory_space<vmem>>) attributes {dimension_semantics = [#tpu.dimension_semantics<parallel>], iteration_bounds = array<i64: 1>, scalar_prefetch = 0 : i64, scratch_operands = 0 : i64, tpu.core_type = #tpu.core_type<tc>, window_params = [{transform_indices = @transform_0, window_bounds = array<i64: 8, 10>}, {pipeline_mode = #tpu.pipeline_mode<synchronous>, transform_indices = @transform_1, window_bounds = array<i64: 10, 384>}, {pipeline_mode = #tpu.pipeline_mode<synchronous>, transform_indices = @transform_2, window_bounds = array<i64: 1, 384>}, {pipeline_mode = #tpu.pipeline_mode<synchronous>, transform_indices = @transform_3, window_bounds = array<i64: 384, 512>}, {pipeline_mode = #tpu.pipeline_mode<synchronous>, transform_indices = @transform_4, window_bounds = array<i64: 1, 512>}, {pipeline_mode = #tpu.pipeline_mode<synchronous>, transform_indices = @transform_5, window_bounds = array<i64: 512, 784>}, {pipeline_mode = #tpu.pipeline_mode<synchronous>, transform_indices = @transform_6, window_bounds = array<i64: 1, 784>}, {transform_indices = @transform_7, window_bounds = array<i64: 8, 784>}]} {
    %c0 = arith.constant 0 : index
    %c0_0 = arith.constant 0 : index
    %0 = vector.load %arg1[%c0, %c0_0] : memref<8x10xf32, #tpu.memory_space<vmem>>, vector<8x10xf32>
    %1 = arith.truncf %0 : vector<8x10xf32> to vector<8x10xbf16>
    %c0_1 = arith.constant 0 : index
    %c0_2 = arith.constant 0 : index
    %2 = vector.load %arg2[%c0_1, %c0_2] : memref<10x384xbf16, #tpu.memory_space<vmem>>, vector<10x384xbf16>
    %cst = arith.constant dense<0.000000e+00> : vector<8x384xf32>
    %3 = tpu.matmul %1, %2, %cst {dimension_numbers = #tpu.dot_dimension_numbers<[1], [0], [0], [1], [0, 0, 1, 1], [], []>} : vector<8x10xbf16>, vector<10x384xbf16>, vector<8x384xf32> -> vector<8x384xf32>
    %c0_3 = arith.constant 0 : index
    %c0_4 = arith.constant 0 : index
    %4 = vector.load %arg3[%c0_3, %c0_4] : memref<1x384xf32, #tpu.memory_space<vmem>>, vector<1x384xf32>
    %5 = vector.broadcast %4 : vector<1x384xf32> to vector<8x384xf32>
    %6 = arith.addf %3, %5 : vector<8x384xf32>
    %cst_5 = arith.constant 0.000000e+00 : f32
    %7 = vector.broadcast %cst_5 : f32 to vector<8x384xf32>
    %8 = arith.maximumf %6, %7 : vector<8x384xf32>
    %9 = arith.truncf %8 : vector<8x384xf32> to vector<8x384xbf16>
    %c0_6 = arith.constant 0 : index
    %c0_7 = arith.constant 0 : index
    %10 = vector.load %arg4[%c0_6, %c0_7] : memref<384x512xbf16, #tpu.memory_space<vmem>>, vector<384x512xbf16>
    %cst_8 = arith.constant dense<0.000000e+00> : vector<8x512xf32>
    %11 = tpu.matmul %9, %10, %cst_8 {dimension_numbers = #tpu.dot_dimension_numbers<[1], [0], [0], [1], [0, 0, 1, 1], [], []>} : vector<8x384xbf16>, vector<384x512xbf16>, vector<8x512xf32> -> vector<8x512xf32>
    %c0_9 = arith.constant 0 : index
    %c0_10 = arith.constant 0 : index
    %12 = vector.load %arg5[%c0_9, %c0_10] : memref<1x512xf32, #tpu.memory_space<vmem>>, vector<1x512xf32>
    %13 = vector.broadcast %12 : vector<1x512xf32> to vector<8x512xf32>
    %14 = arith.addf %11, %13 : vector<8x512xf32>
    %cst_11 = arith.constant 0.000000e+00 : f32
    %15 = vector.broadcast %cst_11 : f32 to vector<8x512xf32>
    %16 = arith.maximumf %14, %15 : vector<8x512xf32>
    %17 = arith.truncf %16 : vector<8x512xf32> to vector<8x512xbf16>
    %c0_12 = arith.constant 0 : index
    %c0_13 = arith.constant 0 : index
    %18 = vector.load %arg6[%c0_12, %c0_13] : memref<512x784xbf16, #tpu.memory_space<vmem>>, vector<512x784xbf16>
    %cst_14 = arith.constant dense<0.000000e+00> : vector<8x784xf32>
    %19 = tpu.matmul %17, %18, %cst_14 {dimension_numbers = #tpu.dot_dimension_numbers<[1], [0], [0], [1], [0, 0, 1, 1], [], []>} : vector<8x512xbf16>, vector<512x784xbf16>, vector<8x784xf32> -> vector<8x784xf32>
    %c0_15 = arith.constant 0 : index
    %c0_16 = arith.constant 0 : index
    %20 = vector.load %arg7[%c0_15, %c0_16] : memref<1x784xf32, #tpu.memory_space<vmem>>, vector<1x784xf32>
    %21 = vector.broadcast %20 : vector<1x784xf32> to vector<8x784xf32>
    %22 = arith.addf %19, %21 : vector<8x784xf32>
    %23 = arith.negf %22 : vector<8x784xf32>
    %24 = math.exp %23 : vector<8x784xf32>
    %cst_17 = arith.constant 1.000000e+00 : f32
    %25 = vector.broadcast %cst_17 : f32 to vector<8x784xf32>
    %26 = arith.addf %25, %24 : vector<8x784xf32>
    %27 = arith.divf %25, %26 : vector<8x784xf32>
    %28 = arith.truncf %27 : vector<8x784xf32> to vector<8x784xbf16>
    %c0_18 = arith.constant 0 : index
    %c0_19 = arith.constant 0 : index
    %29 = vector.load %arg8[%c0_18, %c0_19] : memref<8x784xbf16, #tpu.memory_space<vmem>>, vector<8x784xbf16>
    tpu.vector_store %arg8[%c0_18, %c0_19], %28 {strides = array<i32>} : memref<8x784xbf16, #tpu.memory_space<vmem>>, vector<8x784xbf16>,
    return
  }
  func.func @transform_0(%arg0: i32) -> (i32, i32) {
    %c0_i32 = arith.constant 0 : i32
    %c0_i32_0 = arith.constant 0 : i32
    return %arg0, %c0_i32 : i32, i32
  }
  func.func @transform_1(%arg0: i32) -> (i32, i32) {
    %c0_i32 = arith.constant 0 : i32
    %c0_i32_0 = arith.constant 0 : i32
    %c0_i32_1 = arith.constant 0 : i32
    return %c0_i32, %c0_i32_0 : i32, i32
  }
  func.func @transform_2(%arg0: i32) -> (i32, i32) {
    %c0_i32 = arith.constant 0 : i32
    %c0_i32_0 = arith.constant 0 : i32
    %c0_i32_1 = arith.constant 0 : i32
    return %c0_i32, %c0_i32_0 : i32, i32
  }
  func.func @transform_3(%arg0: i32) -> (i32, i32) {
    %c0_i32 = arith.constant 0 : i32
    %c0_i32_0 = arith.constant 0 : i32
    %c0_i32_1 = arith.constant 0 : i32
    return %c0_i32, %c0_i32_0 : i32, i32
  }
  func.func @transform_4(%arg0: i32) -> (i32, i32) {
    %c0_i32 = arith.constant 0 : i32
    %c0_i32_0 = arith.constant 0 : i32
    %c0_i32_1 = arith.constant 0 : i32
    return %c0_i32, %c0_i32_0 : i32, i32
  }
  func.func @transform_5(%arg0: i32) -> (i32, i32) {
    %c0_i32 = arith.constant 0 : i32
    %c0_i32_0 = arith.constant 0 : i32
    %c0_i32_1 = arith.constant 0 : i32
    return %c0_i32, %c0_i32_0 : i32, i32
  }
  func.func @transform_6(%arg0: i32) -> (i32, i32) {
    %c0_i32 = arith.constant 0 : i32
    %c0_i32_0 = arith.constant 0 : i32
    %c0_i32_1 = arith.constant 0 : i32
    return %c0_i32, %c0_i32_0 : i32, i32
  }
  func.func @transform_7(%arg0: i32) -> (i32, i32) {
    %c0_i32 = arith.constant 0 : i32
    %c0_i32_0 = arith.constant 0 : i32
    return %arg0, %c0_i32 : i32, i32
  }
}

</mosaic_0001>

<llo_original>
// kernel: tpu_custom_call.1
$region0: #{tpu_custom_call.1}
  #allocation0 [shape = 'u32[]', space=smem, size = 0x4, offset = 0x4, fixed_abs, tag = 'smem constant byte address 0x4 - core index']
  #allocation1 [shape = 'u32[72,128]{1,0:T(1,128)}', space=vmem, size = 0x9000, scoped, tag = 'internal scratch']
  %s0 = inlined_call_operand.vmem [shape: f32[8,10], index: 0, kind: input, shape index: {}]
  %s1 = inlined_call_operand.vmem [shape: bf16[10,384], index: 1, kind: input, shape index: {}]
  %s2 = inlined_call_operand.vmem [shape: f32[1,384], index: 2, kind: input, shape index: {}]
  %s3 = inlined_call_operand.vmem [shape: bf16[384,512], index: 3, kind: input, shape index: {}]
  %s4 = inlined_call_operand.vmem [shape: f32[1,512], index: 4, kind: input, shape index: {}]
  %s5 = inlined_call_operand.vmem [shape: bf16[512,784], index: 5, kind: input, shape index: {}]
  %s6 = inlined_call_operand.vmem [shape: f32[1,784], index: 6, kind: input, shape index: {}]
  %s7 = inlined_call_operand.hbm [shape: bf16[8,784], index: 7, kind: output, shape index: {}]
  %s8 = sld [smem:[#allocation0]]
  $region38: #{tpu_custom_call.1} parent=0
    _
  %s10 = ssub.s32 1, %s8
  %s11 = scalar_select 0, %s10, %s8
  $region1: #{tpu_custom_call.1} parent=0
    #allocation2 [shape = 'u8[14336]{0}', space=vmem, size = 0x3800, scoped, tag = 'output window, operand 0, single buffered']
    #allocation3 [shape = 's32[1]{0}', space=sflag, size = 0x4, scoped, tag = 'scoped memory for tpu_custom_call.1']
    %12 = vsyncpa [#allocation3], 0
    // Predicated region
    $region2: #{tpu_custom_call.1} parent=1 // pred_check
      _
    $region3: #{tpu_custom_call.1} parent=1 // pred_check_branch
      %14 = sbr.rel (0) target = $region5
    $region4: #{tpu_custom_call.1} parent=1 // pred_region
      _
    $region5: #{tpu_custom_call.1} parent=1 // pred_fallthru
      _
    // Predicated region
    $region6: #{tpu_custom_call.1} parent=1 // pred_check
      _
    $region7: #{tpu_custom_call.1} parent=1 // pred_check_branch
      %16 = sbr.rel (0) target = $region9
    $region8: #{tpu_custom_call.1} parent=1 // pred_region
      _
    $region9: #{tpu_custom_call.1} parent=1 // pred_fallthru
      _
    // Predicated region
    $region10: #{tpu_custom_call.1} parent=1 // pred_check
      _
    $region11: #{tpu_custom_call.1} parent=1 // pred_check_branch
      %18 = sbr.rel (0) target = $region13
    $region12: #{tpu_custom_call.1} parent=1 // pred_region
      _
    $region13: #{tpu_custom_call.1} parent=1 // pred_fallthru
      _
    // Predicated region
    $region14: #{tpu_custom_call.1} parent=1 // pred_check
      _
    $region15: #{tpu_custom_call.1} parent=1 // pred_check_branch
      %20 = sbr.rel (0) target = $region17
    $region16: #{tpu_custom_call.1} parent=1 // pred_region
      _
    $region17: #{tpu_custom_call.1} parent=1 // pred_fallthru
      _
    // Predicated region
    $region18: #{tpu_custom_call.1} parent=1 // pred_check
      _
    $region19: #{tpu_custom_call.1} parent=1 // pred_check_branch
      %22 = sbr.rel (0) target = $region21
    $region20: #{tpu_custom_call.1} parent=1 // pred_region
      _
    $region21: #{tpu_custom_call.1} parent=1 // pred_fallthru
      _
    // Predicated region
    $region22: #{tpu_custom_call.1} parent=1 // pred_check
      _
    $region23: #{tpu_custom_call.1} parent=1 // pred_check_branch
      %24 = sbr.rel (0) target = $region25
    $region24: #{tpu_custom_call.1} parent=1 // pred_region
      _
    $region25: #{tpu_custom_call.1} parent=1 // pred_fallthru
      _
    // Predicated region
    $region26: #{tpu_custom_call.1} parent=1 // pred_check
      _
    $region27: #{tpu_custom_call.1} parent=1 // pred_check_branch
      %26 = sbr.rel (0) target = $region29
    $region28: #{tpu_custom_call.1} parent=1 // pred_region
      _
    $region29: #{tpu_custom_call.1} parent=1 // pred_fallthru
      _
    %v28 = vld [vmem:[%s0] sm:$0xff]
    %v29 = vpack.c.bf16 %v28, %v28
    %v30 = vld [vmem:[%s1] sm:$0xff]
    %v31 = vld [vmem:[%s1 + $0x8] sm:$0xf]
    %v32 = vld [vmem:[%s1 + $0xc] sm:$0x11]
    %v33 = vld [vmem:[%s1 + $0x14] sm:$0x1]
    %v34 = vld [vmem:[%s2] sm:$0x7]
    %v36 = vperm.slane %v34, 0
    %v37 = vperm.slane %v34, 1
    %v38 = vperm.slane %v34, 2
    %v46 = vunpack.c.l.b16 %v30
    %v47 = vunpack.c.h.b16 %v30
    %v48 = vunpack.c.l.b16 %v31
    %v49 = vunpack.c.l.b16 %v32
    %v50 = vunpack.c.h.b16 %v32
    %v51 = vunpack.c.l.b16 %v33
    %v52 = vpack.c.b16 %v49, %v46
    %v53 = vpack.c.b16 %v50, %v47
    %v54 = vpack.c.b16 %v51, %v48
    %vm55 = vcmask 80896
    %v57 = vsel %vm55, %v29, 0
    %vm59 = vcmask 1044480
    %v61 = vsel %vm59, %v52, 0
    %v64 = vsel %vm59, %v53, 0
    %v67 = vsel %vm59, %v54, 0
    %69 = vmatpush.bf16.msra.mxu0 0
    %70 = vmatpush.bf16.msra.mxu0 0
    %71 = vmatpush.bf16.msra.mxu0 0
    %72 = vmatpush.bf16.msra.mxu0 0
    %73 = vmatpush.bf16.msra.mxu0 0
    %74 = vmatpush.bf16.msra.mxu0 0
    %75 = vmatpush.bf16.msra.mxu0 0
    %76 = vmatpush.bf16.msra.mxu0 %v61
    %77 = vmatmul.bf16.gmra.mxu0 %v57
    %v78 = vpop.f32.mrf.mxu0
    %v79 = vadd.f32 %v36, %v78
    %v80 = vpop.f32.mrf.mxu0
    %81 = vdwg.mxu0
    %82 = vmatpush.bf16.msra.mxu0 0
    %83 = vmatpush.bf16.msra.mxu0 0
    %84 = vmatpush.bf16.msra.mxu0 0
    %85 = vmatpush.bf16.msra.mxu0 0
    %86 = vmatpush.bf16.msra.mxu0 0
    %87 = vmatpush.bf16.msra.mxu0 0
    %88 = vmatpush.bf16.msra.mxu0 0
    %89 = vmatpush.bf16.msra.mxu0 %v64
    %90 = vmatmul.bf16.gmra.mxu0 %v57
    %v91 = vpop.f32.mrf.mxu0
    %v92 = vadd.f32 %v37, %v91
    %v93 = vpop.f32.mrf.mxu0
    %94 = vdwg.mxu0
    %95 = vmatpush.bf16.msra.mxu0 0
    %96 = vmatpush.bf16.msra.mxu0 0
    %97 = vmatpush.bf16.msra.mxu0 0
    %98 = vmatpush.bf16.msra.mxu0 0
    %99 = vmatpush.bf16.msra.mxu0 0
    %100 = vmatpush.bf16.msra.mxu0 0
    %101 = vmatpush.bf16.msra.mxu0 0
    %102 = vmatpush.bf16.msra.mxu0 %v67
    %103 = vmatmul.bf16.gmra.mxu0 %v57
    %v104 = vpop.f32.mrf.mxu0
    %v105 = vadd.f32 %v38, %v104
    %v106 = vpop.f32.mrf.mxu0
    %107 = vdwg.mxu0
    %v108 = vmax.f32 %v79, 0.0
    %v109 = vmax.f32 %v92, 0.0
    %v110 = vmax.f32 %v105, 0.0
    %v111 = vpack.c.bf16 %v108, %v108
    %v112 = vpack.c.bf16 %v109, %v109
    %v113 = vpack.c.bf16 %v110, %v110
    %v114 = vld [vmem:[%s3] sm:$0xff]
    %v115 = vld [vmem:[%s3 + $0x8] sm:$0xff]
    %v116 = vld [vmem:[%s3 + $0x10] sm:$0xff]
    %v117 = vld [vmem:[%s3 + $0x18] sm:$0xff]
    %v118 = vld [vmem:[%s3 + $0x20] sm:$0xff]
    %v119 = vld [vmem:[%s3 + $0x28] sm:$0xff]
    %v120 = vld [vmem:[%s3 + $0x30] sm:$0xff]
    %v121 = vld [vmem:[%s3 + $0x38] sm:$0xff]
    %v122 = vld [vmem:[%s3 + $0x40] sm:$0xff]
    %v123 = vld [vmem:[%s3 + $0x48] sm:$0xff]
    %v124 = vld [vmem:[%s3 + $0x50] sm:$0xff]
    %v125 = vld [vmem:[%s3 + $0x58] sm:$0xff]
    %v126 = vld [vmem:[%s3 + $0x60] sm:$0xff]
    %v127 = vld [vmem:[%s3 + $0x68] sm:$0xff]
    %v128 = vld [vmem:[%s3 + $0x70] sm:$0xff]
    %v129 = vld [vmem:[%s3 + $0x78] sm:$0xff]
    %v130 = vld [vmem:[%s3 + $0x80] sm:$0xff]
    %v131 = vld [vmem:[%s3 + $0x88] sm:$0xff]
    %v132 = vld [vmem:[%s3 + $0x90] sm:$0xff]
    %v133 = vld [vmem:[%s3 + $0x98] sm:$0xff]
    %v134 = vld [vmem:[%s3 + $0xa0] sm:$0xff]
    %v135 = vld [vmem:[%s3 + $0xa8] sm:$0xff]
    %v136 = vld [vmem:[%s3 + $0xb0] sm:$0xff]
    %v137 = vld [vmem:[%s3 + $0xb8] sm:$0xff]
    %v138 = vld [vmem:[%s3 + $0xc0] sm:$0xff]
    %v139 = vld [vmem:[%s3 + $0xc8] sm:$0xff]
    %v140 = vld [vmem:[%s3 + $0xd0] sm:$0xff]
    %v141 = vld [vmem:[%s3 + $0xd8] sm:$0xff]
    %v142 = vld [vmem:[%s3 + $0xe0] sm:$0xff]
    %v143 = vld [vmem:[%s3 + $0xe8] sm:$0xff]
    %v144 = vld [vmem:[%s3 + $0xf0] sm:$0xff]
    %v145 = vld [vmem:[%s3 + $0xf8] sm:$0xff]
    %v146 = vld [vmem:[%s3 + $0x100] sm:$0xff]
    %v147 = vld [vmem:[%s3 + $0x108] sm:$0xff]
    %v148 = vld [vmem:[%s3 + $0x110] sm:$0xff]
    %v149 = vld [vmem:[%s3 + $0x118] sm:$0xff]
    %v150 = vld [vmem:[%s3 + $0x120] sm:$0xff]
    %v151 = vld [vmem:[%s3 + $0x128] sm:$0xff]
    %v152 = vld [vmem:[%s3 + $0x130] sm:$0xff]
    %v153 = vld [vmem:[%s3 + $0x138] sm:$0xff]
    %v154 = vld [vmem:[%s3 + $0x140] sm:$0xff]
    %v155 = vld [vmem:[%s3 + $0x148] sm:$0xff]
    %v156 = vld [vmem:[%s3 + $0x150] sm:$0xff]
    %v157 = vld [vmem:[%s3 + $0x158] sm:$0xff]
    %v158 = vld [vmem:[%s3 + $0x160] sm:$0xff]
    %v159 = vld [vmem:[%s3 + $0x168] sm:$0xff]
    %v160 = vld [vmem:[%s3 + $0x170] sm:$0xff]
    %v161 = vld [vmem:[%s3 + $0x178] sm:$0xff]
    %v162 = vld [vmem:[%s3 + $0x180] sm:$0xff]
    %v163 = vld [vmem:[%s3 + $0x188] sm:$0xff]
    %v164 = vld [vmem:[%s3 + $0x190] sm:$0xff]
    %v165 = vld [vmem:[%s3 + $0x198] sm:$0xff]
    %v166 = vld [vmem:[%s3 + $0x1a0] sm:$0xff]
    %v167 = vld [vmem:[%s3 + $0x1a8] sm:$0xff]
    %v168 = vld [vmem:[%s3 + $0x1b0] sm:$0xff]
    %v169 = vld [vmem:[%s3 + $0x1b8] sm:$0xff]
    %v170 = vld [vmem:[%s3 + $0x1c0] sm:$0xff]
    %v171 = vld [vmem:[%s3 + $0x1c8] sm:$0xff]
    %v172 = vld [vmem:[%s3 + $0x1d0] sm:$0xff]
    %v173 = vld [vmem:[%s3 + $0x1d8] sm:$0xff]
    %v174 = vld [vmem:[%s3 + $0x1e0] sm:$0xff]
    %v175 = vld [vmem:[%s3 + $0x1e8] sm:$0xff]
    %v176 = vld [vmem:[%s3 + $0x1f0] sm:$0xff]
    %v177 = vld [vmem:[%s3 + $0x1f8] sm:$0xff]
    %v178 = vld [vmem:[%s3 + $0x200] sm:$0xff]
    %v179 = vld [vmem:[%s3 + $0x208] sm:$0xff]
    %v180 = vld [vmem:[%s3 + $0x210] sm:$0xff]
    %v181 = vld [vmem:[%s3 + $0x218] sm:$0xff]
    %v182 = vld [vmem:[%s3 + $0x220] sm:$0xff]
    %v183 = vld [vmem:[%s3 + $0x228] sm:$0xff]
    %v184 = vld [vmem:[%s3 + $0x230] sm:$0xff]
    %v185 = vld [vmem:[%s3 + $0x238] sm:$0xff]
    %v186 = vld [vmem:[%s3 + $0x240] sm:$0xff]
    %v187 = vld [vmem:[%s3 + $0x248] sm:$0xff]
    %v188 = vld [vmem:[%s3 + $0x250] sm:$0xff]
    %v189 = vld [vmem:[%s3 + $0x258] sm:$0xff]
    %v190 = vld [vmem:[%s3 + $0x260] sm:$0xff]
    %v191 = vld [vmem:[%s3 + $0x268] sm:$0xff]
    %v192 = vld [vmem:[%s3 + $0x270] sm:$0xff]
    %v193 = vld [vmem:[%s3 + $0x278] sm:$0xff]
    %v194 = vld [vmem:[%s3 + $0x280] sm:$0xff]
    %v195 = vld [vmem:[%s3 + $0x288] sm:$0xff]
    %v196 = vld [vmem:[%s3 + $0x290] sm:$0xff]
    %v197 = vld [vmem:[%s3 + $0x298] sm:$0xff]
    %v198 = vld [vmem:[%s3 + $0x2a0] sm:$0xff]
    %v199 = vld [vmem:[%s3 + $0x2a8] sm:$0xff]
    %v200 = vld [vmem:[%s3 + $0x2b0] sm:$0xff]
    %v201 = vld [vmem:[%s3 + $0x2b8] sm:$0xff]
    %v202 = vld [vmem:[%s3 + $0x2c0] sm:$0xff]
    %v203 = vld [vmem:[%s3 + $0x2c8] sm:$0xff]
    %v204 = vld [vmem:[%s3 + $0x2d0] sm:$0xff]
    %v205 = vld [vmem:[%s3 + $0x2d8] sm:$0xff]
    %v206 = vld [vmem:[%s3 + $0x2e0] sm:$0xff]
    %v207 = vld [vmem:[%s3 + $0x2e8] sm:$0xff]
    %v208 = vld [vmem:[%s3 + $0x2f0] sm:$0xff]
    %v209 = vld [vmem:[%s3 + $0x2f8] sm:$0xff]
    %v210 = vld [vmem:[%s4] sm:$0xf]
    %v212 = vperm.slane %v210, 0
    %v213 = vperm.slane %v210, 1
    %v214 = vperm.slane %v210, 2
    %v215 = vperm.slane %v210, 3
    %v316 = vunpack.c.l.b16 %v114
    %v317 = vunpack.c.h.b16 %v114
    %v318 = vunpack.c.l.b16 %v115
    %v319 = vunpack.c.h.b16 %v115
    %v320 = vunpack.c.l.b16 %v116
    %v321 = vunpack.c.h.b16 %v116
    %v322 = vunpack.c.l.b16 %v117
    %v323 = vunpack.c.h.b16 %v117
    %v324 = vunpack.c.l.b16 %v118
    %v325 = vunpack.c.h.b16 %v118
    %v326 = vunpack.c.l.b16 %v119
    %v327 = vunpack.c.h.b16 %v119
    %v328 = vunpack.c.l.b16 %v120
    %v329 = vunpack.c.h.b16 %v120
    %v330 = vunpack.c.l.b16 %v121
    %v331 = vunpack.c.h.b16 %v121
    %v332 = vunpack.c.l.b16 %v122
    %v333 = vunpack.c.h.b16 %v122
    %v334 = vunpack.c.l.b16 %v123
    %v335 = vunpack.c.h.b16 %v123
    %v336 = vunpack.c.l.b16 %v124
    %v337 = vunpack.c.h.b16 %v124
    %v338 = vunpack.c.l.b16 %v125
    %v339 = vunpack.c.h.b16 %v125
    %v340 = vunpack.c.l.b16 %v126
    %v341 = vunpack.c.h.b16 %v126
    %v342 = vunpack.c.l.b16 %v127
    %v343 = vunpack.c.h.b16 %v127
    %v344 = vunpack.c.l.b16 %v128
    %v345 = vunpack.c.h.b16 %v128
    %v346 = vunpack.c.l.b16 %v129
    %v347 = vunpack.c.h.b16 %v129
    %v348 = vunpack.c.l.b16 %v130
    %v349 = vunpack.c.h.b16 %v130
    %v350 = vunpack.c.l.b16 %v131
    %v351 = vunpack.c.h.b16 %v131
    %v352 = vunpack.c.l.b16 %v132
    %v353 = vunpack.c.h.b16 %v132
    %v354 = vunpack.c.l.b16 %v133
    %v355 = vunpack.c.h.b16 %v133
    %v356 = vunpack.c.l.b16 %v134
    %v357 = vunpack.c.h.b16 %v134
    %v358 = vunpack.c.l.b16 %v135
    %v359 = vunpack.c.h.b16 %v135
    %v360 = vunpack.c.l.b16 %v136
    %v361 = vunpack.c.h.b16 %v136
    %v362 = vunpack.c.l.b16 %v137
    %v363 = vunpack.c.h.b16 %v137
    %v364 = vunpack.c.l.b16 %v138
    %v365 = vunpack.c.h.b16 %v138
    %v366 = vunpack.c.l.b16 %v139
    %v367 = vunpack.c.h.b16 %v139
    %v368 = vunpack.c.l.b16 %v140
    %v369 = vunpack.c.h.b16 %v140
    %v370 = vunpack.c.l.b16 %v141
    %v371 = vunpack.c.h.b16 %v141
    %v372 = vunpack.c.l.b16 %v142
    %v373 = vunpack.c.h.b16 %v142
    %v374 = vunpack.c.l.b16 %v143
    %v375 = vunpack.c.h.b16 %v143
    %v376 = vunpack.c.l.b16 %v144
    %v377 = vunpack.c.h.b16 %v144
    %v378 = vunpack.c.l.b16 %v145
    %v379 = vunpack.c.h.b16 %v145
    %v380 = vunpack.c.l.b16 %v146
    %v381 = vunpack.c.h.b16 %v146
    %v382 = vunpack.c.l.b16 %v147
    %v383 = vunpack.c.h.b16 %v147
    %v384 = vunpack.c.l.b16 %v148
    %v385 = vunpack.c.h.b16 %v148
    %v386 = vunpack.c.l.b16 %v149
    %v387 = vunpack.c.h.b16 %v149
    %v388 = vunpack.c.l.b16 %v150
    %v389 = vunpack.c.h.b16 %v150
    %v390 = vunpack.c.l.b16 %v151
    %v391 = vunpack.c.h.b16 %v151
    %v392 = vunpack.c.l.b16 %v152
    %v393 = vunpack.c.h.b16 %v152
    %v394 = vunpack.c.l.b16 %v153
    %v395 = vunpack.c.h.b16 %v153
    %v396 = vunpack.c.l.b16 %v154
    %v397 = vunpack.c.h.b16 %v154
    %v398 = vunpack.c.l.b16 %v155
    %v399 = vunpack.c.h.b16 %v155
    %v400 = vunpack.c.l.b16 %v156
    %v401 = vunpack.c.h.b16 %v156
    %v402 = vunpack.c.l.b16 %v157
    %v403 = vunpack.c.h.b16 %v157
    %v404 = vunpack.c.l.b16 %v158
    %v405 = vunpack.c.h.b16 %v158
    %v406 = vunpack.c.l.b16 %v159
    %v407 = vunpack.c.h.b16 %v159
    %v408 = vunpack.c.l.b16 %v160
    %v409 = vunpack.c.h.b16 %v160
    %v410 = vunpack.c.l.b16 %v161
    %v411 = vunpack.c.h.b16 %v161
    %v412 = vunpack.c.l.b16 %v162
    %v413 = vunpack.c.h.b16 %v162
    %v414 = vunpack.c.l.b16 %v163
    %v415 = vunpack.c.h.b16 %v163
    %v416 = vunpack.c.l.b16 %v164
    %v417 = vunpack.c.h.b16 %v164
    %v418 = vunpack.c.l.b16 %v165
    %v419 = vunpack.c.h.b16 %v165
    %v420 = vunpack.c.l.b16 %v166
    %v421 = vunpack.c.h.b16 %v166
    %v422 = vunpack.c.l.b16 %v167
    %v423 = vunpack.c.h.b16 %v167
    %v424 = vunpack.c.l.b16 %v168
    %v425 = vunpack.c.h.b16 %v168
    %v426 = vunpack.c.l.b16 %v169
    %v427 = vunpack.c.h.b16 %v169
    %v428 = vunpack.c.l.b16 %v170
    %v429 = vunpack.c.h.b16 %v170
    %v430 = vunpack.c.l.b16 %v171
    %v431 = vunpack.c.h.b16 %v171
    %v432 = vunpack.c.l.b16 %v172
    %v433 = vunpack.c.h.b16 %v172
    %v434 = vunpack.c.l.b16 %v173
    %v435 = vunpack.c.h.b16 %v173
    %v436 = vunpack.c.l.b16 %v174
    %v437 = vunpack.c.h.b16 %v174
    %v438 = vunpack.c.l.b16 %v175
    %v439 = vunpack.c.h.b16 %v175
    %v440 = vunpack.c.l.b16 %v176
    %v441 = vunpack.c.h.b16 %v176
    %v442 = vunpack.c.l.b16 %v177
    %v443 = vunpack.c.h.b16 %v177
    %v444 = vunpack.c.l.b16 %v178
    %v445 = vunpack.c.h.b16 %v178
    %v446 = vunpack.c.l.b16 %v179
    %v447 = vunpack.c.h.b16 %v179
    %v448 = vunpack.c.l.b16 %v180
    %v449 = vunpack.c.h.b16 %v180
    %v450 = vunpack.c.l.b16 %v181
    %v451 = vunpack.c.h.b16 %v181
    %v452 = vunpack.c.l.b16 %v182
    %v453 = vunpack.c.h.b16 %v182
    %v454 = vunpack.c.l.b16 %v183
    %v455 = vunpack.c.h.b16 %v183
    %v456 = vunpack.c.l.b16 %v184
    %v457 = vunpack.c.h.b16 %v184
    %v458 = vunpack.c.l.b16 %v185
    %v459 = vunpack.c.h.b16 %v185
    %v460 = vunpack.c.l.b16 %v186
    %v461 = vunpack.c.h.b16 %v186
    %v462 = vunpack.c.l.b16 %v187
    %v463 = vunpack.c.h.b16 %v187
    %v464 = vunpack.c.l.b16 %v188
    %v465 = vunpack.c.h.b16 %v188
    %v466 = vunpack.c.l.b16 %v189
    %v467 = vunpack.c.h.b16 %v189
    %v468 = vunpack.c.l.b16 %v190
    %v469 = vunpack.c.h.b16 %v190
    %v470 = vunpack.c.l.b16 %v191
    %v471 = vunpack.c.h.b16 %v191
    %v472 = vunpack.c.l.b16 %v192
    %v473 = vunpack.c.h.b16 %v192
    %v474 = vunpack.c.l.b16 %v193
    %v475 = vunpack.c.h.b16 %v193
    %v476 = vunpack.c.l.b16 %v194
    %v477 = vunpack.c.h.b16 %v194
    %v478 = vunpack.c.l.b16 %v195
    %v479 = vunpack.c.h.b16 %v195
    %v480 = vunpack.c.l.b16 %v196
    %v481 = vunpack.c.h.b16 %v196
    %v482 = vunpack.c.l.b16 %v197
    %v483 = vunpack.c.h.b16 %v197
    %v484 = vunpack.c.l.b16 %v198
    %v485 = vunpack.c.h.b16 %v198
    %v486 = vunpack.c.l.b16 %v199
    %v487 = vunpack.c.h.b16 %v199
    %v488 = vunpack.c.l.b16 %v200
    %v489 = vunpack.c.h.b16 %v200
    %v490 = vunpack.c.l.b16 %v201
    %v491 = vunpack.c.h.b16 %v201
    %v492 = vunpack.c.l.b16 %v202
    %v493 = vunpack.c.h.b16 %v202
    %v494 = vunpack.c.l.b16 %v203
    %v495 = vunpack.c.h.b16 %v203
    %v496 = vunpack.c.l.b16 %v204
    %v497 = vunpack.c.h.b16 %v204
    %v498 = vunpack.c.l.b16 %v205
    %v499 = vunpack.c.h.b16 %v205
    %v500 = vunpack.c.l.b16 %v206
    %v501 = vunpack.c.h.b16 %v206
    %v502 = vunpack.c.l.b16 %v207
    %v503 = vunpack.c.h.b16 %v207
    %v504 = vunpack.c.l.b16 %v208
    %v505 = vunpack.c.h.b16 %v208
    %v506 = vunpack.c.l.b16 %v209
    %v507 = vunpack.c.h.b16 %v209
    %v508 = vpack.c.b16 %v320, %v316
    %v509 = vpack.c.b16 %v321, %v317
    %v510 = vpack.c.b16 %v322, %v318
    %v511 = vpack.c.b16 %v323, %v319
    %v512 = vpack.c.b16 %v328, %v324
    %v513 = vpack.c.b16 %v329, %v325
    %v514 = vpack.c.b16 %v330, %v326
    %v515 = vpack.c.b16 %v331, %v327
    %v516 = vpack.c.b16 %v336, %v332
    %v517 = vpack.c.b16 %v337, %v333
    %v518 = vpack.c.b16 %v338, %v334
    %v519 = vpack.c.b16 %v339, %v335
    %v520 = vpack.c.b16 %v344, %v340
    %v521 = vpack.c.b16 %v345, %v341
    %v522 = vpack.c.b16 %v346, %v342
    %v523 = vpack.c.b16 %v347, %v343
    %v524 = vpack.c.b16 %v352, %v348
    %v525 = vpack.c.b16 %v353, %v349
    %v526 = vpack.c.b16 %v354, %v350
    %v527 = vpack.c.b16 %v355, %v351
    %v528 = vpack.c.b16 %v360, %v356
    %v529 = vpack.c.b16 %v361, %v357
    %v530 = vpack.c.b16 %v362, %v358
    %v531 = vpack.c.b16 %v363, %v359
    %v532 = vpack.c.b16 %v368, %v364
    %v533 = vpack.c.b16 %v369, %v365
    %v534 = vpack.c.b16 %v370, %v366
    %v535 = vpack.c.b16 %v371, %v367
    %v536 = vpack.c.b16 %v376, %v372
    %v537 = vpack.c.b16 %v377, %v373
    %v538 = vpack.c.b16 %v378, %v374
    %v539 = vpack.c.b16 %v379, %v375
    %v540 = vpack.c.b16 %v384, %v380
    %v541 = vpack.c.b16 %v385, %v381
    %v542 = vpack.c.b16 %v386, %v382
    %v543 = vpack.c.b16 %v387, %v383
    %v544 = vpack.c.b16 %v392, %v388
    %v545 = vpack.c.b16 %v393, %v389
    %v546 = vpack.c.b16 %v394, %v390
    %v547 = vpack.c.b16 %v395, %v391
    %v548 = vpack.c.b16 %v400, %v396
    %v549 = vpack.c.b16 %v401, %v397
    %v550 = vpack.c.b16 %v402, %v398
    %v551 = vpack.c.b16 %v403, %v399
    %v552 = vpack.c.b16 %v408, %v404
    %v553 = vpack.c.b16 %v409, %v405
    %v554 = vpack.c.b16 %v410, %v406
    %v555 = vpack.c.b16 %v411, %v407
    %v556 = vpack.c.b16 %v416, %v412
    %v557 = vpack.c.b16 %v417, %v413
    %v558 = vpack.c.b16 %v418, %v414
    %v559 = vpack.c.b16 %v419, %v415
    %v560 = vpack.c.b16 %v424, %v420
    %v561 = vpack.c.b16 %v425, %v421
    %v562 = vpack.c.b16 %v426, %v422
    %v563 = vpack.c.b16 %v427, %v423
    %v564 = vpack.c.b16 %v432, %v428
    %v565 = vpack.c.b16 %v433, %v429
    %v566 = vpack.c.b16 %v434, %v430
    %v567 = vpack.c.b16 %v435, %v431
    %v568 = vpack.c.b16 %v440, %v436
    %v569 = vpack.c.b16 %v441, %v437
    %v570 = vpack.c.b16 %v442, %v438
    %v571 = vpack.c.b16 %v443, %v439
    %v572 = vpack.c.b16 %v448, %v444
    %v573 = vpack.c.b16 %v449, %v445
    %v574 = vpack.c.b16 %v450, %v446
    %v575 = vpack.c.b16 %v451, %v447
    %v576 = vpack.c.b16 %v456, %v452
    %v577 = vpack.c.b16 %v457, %v453
    %v578 = vpack.c.b16 %v458, %v454
    %v579 = vpack.c.b16 %v459, %v455
    %v580 = vpack.c.b16 %v464, %v460
    %v581 = vpack.c.b16 %v465, %v461
    %v582 = vpack.c.b16 %v466, %v462
    %v583 = vpack.c.b16 %v467, %v463
    %v584 = vpack.c.b16 %v472, %v468
    %v585 = vpack.c.b16 %v473, %v469
    %v586 = vpack.c.b16 %v474, %v470
    %v587 = vpack.c.b16 %v475, %v471
    %v588 = vpack.c.b16 %v480, %v476
    %v589 = vpack.c.b16 %v481, %v477
    %v590 = vpack.c.b16 %v482, %v478
    %v591 = vpack.c.b16 %v483, %v479
    %v592 = vpack.c.b16 %v488, %v484
    %v593 = vpack.c.b16 %v489, %v485
    %v594 = vpack.c.b16 %v490, %v486
    %v595 = vpack.c.b16 %v491, %v487
    %v596 = vpack.c.b16 %v496, %v492
    %v597 = vpack.c.b16 %v497, %v493
    %v598 = vpack.c.b16 %v498, %v494
    %v599 = vpack.c.b16 %v499, %v495
    %v600 = vpack.c.b16 %v504, %v500
    %v601 = vpack.c.b16 %v505, %v501
    %v602 = vpack.c.b16 %v506, %v502
    %v603 = vpack.c.b16 %v507, %v503
    %700 = vmatpush.bf16.msra.mxu0 %v536
    %701 = vmatpush.bf16.msra.mxu0 %v532
    %702 = vmatpush.bf16.msra.mxu0 %v528
    %703 = vmatpush.bf16.msra.mxu0 %v524
    %704 = vmatpush.bf16.msra.mxu0 %v520
    %705 = vmatpush.bf16.msra.mxu0 %v516
    %706 = vmatpush.bf16.msra.mxu0 %v512
    %707 = vmatpush.bf16.msra.mxu0 %v508
    %708 = vmatmul.bf16.gmra.mxu0 %v111
    %v709 = vpop.f32.mrf.mxu0
    %v710 = vadd.f32 %v212, %v709
    %v711 = vpop.f32.mrf.mxu0
    %712 = vdwg.mxu0
    %713 = vmatpush.bf16.msra.mxu0 %v568
    %714 = vmatpush.bf16.msra.mxu0 %v564
    %715 = vmatpush.bf16.msra.mxu0 %v560
    %716 = vmatpush.bf16.msra.mxu0 %v556
    %717 = vmatpush.bf16.msra.mxu0 %v552
    %718 = vmatpush.bf16.msra.mxu0 %v548
    %719 = vmatpush.bf16.msra.mxu0 %v544
    %720 = vmatpush.bf16.msra.mxu0 %v540
    %721 = vmatmul.bf16.gmra.mxu0 %v112
    %v722 = vpop.f32.mrf.mxu0
    %v723 = vadd.f32 %v710, %v722
    %v724 = vpop.f32.mrf.mxu0
    %725 = vdwg.mxu0
    %726 = vmatpush.bf16.msra.mxu0 %v600
    %727 = vmatpush.bf16.msra.mxu0 %v596
    %728 = vmatpush.bf16.msra.mxu0 %v592
    %729 = vmatpush.bf16.msra.mxu0 %v588
    %730 = vmatpush.bf16.msra.mxu0 %v584
    %731 = vmatpush.bf16.msra.mxu0 %v580
    %732 = vmatpush.bf16.msra.mxu0 %v576
    %733 = vmatpush.bf16.msra.mxu0 %v572
    %734 = vmatmul.bf16.gmra.mxu0 %v113
    %v735 = vpop.f32.mrf.mxu0
    %v736 = vadd.f32 %v723, %v735
    %v737 = vpop.f32.mrf.mxu0
    %738 = vdwg.mxu0
    %739 = vmatpush.bf16.msra.mxu0 %v537
    %740 = vmatpush.bf16.msra.mxu0 %v533
    %741 = vmatpush.bf16.msra.mxu0 %v529
    %742 = vmatpush.bf16.msra.mxu0 %v525
    %743 = vmatpush.bf16.msra.mxu0 %v521
    %744 = vmatpush.bf16.msra.mxu0 %v517
    %745 = vmatpush.bf16.msra.mxu0 %v513
    %746 = vmatpush.bf16.msra.mxu0 %v509
    %747 = vmatmul.bf16.gmra.mxu0 %v111
    %v748 = vpop.f32.mrf.mxu0
    %v749 = vadd.f32 %v213, %v748
    %v750 = vpop.f32.mrf.mxu0
    %751 = vdwg.mxu0
    %752 = vmatpush.bf16.msra.mxu0 %v569
    %753 = vmatpush.bf16.msra.mxu0 %v565
    %754 = vmatpush.bf16.msra.mxu0 %v561
    %755 = vmatpush.bf16.msra.mxu0 %v557
    %756 = vmatpush.bf16.msra.mxu0 %v553
    %757 = vmatpush.bf16.msra.mxu0 %v549
    %758 = vmatpush.bf16.msra.mxu0 %v545
    %759 = vmatpush.bf16.msra.mxu0 %v541
    %760 = vmatmul.bf16.gmra.mxu0 %v112
    %v761 = vpop.f32.mrf.mxu0
    %v762 = vadd.f32 %v749, %v761
    %v763 = vpop.f32.mrf.mxu0
    %764 = vdwg.mxu0
    %765 = vmatpush.bf16.msra.mxu0 %v601
    %766 = vmatpush.bf16.msra.mxu0 %v597
    %767 = vmatpush.bf16.msra.mxu0 %v593
    %768 = vmatpush.bf16.msra.mxu0 %v589
    %769 = vmatpush.bf16.msra.mxu0 %v585
    %770 = vmatpush.bf16.msra.mxu0 %v581
    %771 = vmatpush.bf16.msra.mxu0 %v577
    %772 = vmatpush.bf16.msra.mxu0 %v573
    %773 = vmatmul.bf16.gmra.mxu0 %v113
    %v774 = vpop.f32.mrf.mxu0
    %v775 = vadd.f32 %v762, %v774
    %v776 = vpop.f32.mrf.mxu0
    %777 = vdwg.mxu0
    %778 = vmatpush.bf16.msra.mxu0 %v538
    %779 = vmatpush.bf16.msra.mxu0 %v534
    %780 = vmatpush.bf16.msra.mxu0 %v530
    %781 = vmatpush.bf16.msra.mxu0 %v526
    %782 = vmatpush.bf16.msra.mxu0 %v522
    %783 = vmatpush.bf16.msra.mxu0 %v518
    %784 = vmatpush.bf16.msra.mxu0 %v514
    %785 = vmatpush.bf16.msra.mxu0 %v510
    %786 = vmatmul.bf16.gmra.mxu0 %v111
    %v787 = vpop.f32.mrf.mxu0
    %v788 = vadd.f32 %v214, %v787
    %v789 = vpop.f32.mrf.mxu0
    %790 = vdwg.mxu0
    %791 = vmatpush.bf16.msra.mxu0 %v570
    %792 = vmatpush.bf16.msra.mxu0 %v566
    %793 = vmatpush.bf16.msra.mxu0 %v562
    %794 = vmatpush.bf16.msra.mxu0 %v558
    %795 = vmatpush.bf16.msra.mxu0 %v554
    %796 = vmatpush.bf16.msra.mxu0 %v550
    %797 = vmatpush.bf16.msra.mxu0 %v546
    %798 = vmatpush.bf16.msra.mxu0 %v542
    %799 = vmatmul.bf16.gmra.mxu0 %v112
    %v800 = vpop.f32.mrf.mxu0
    %v801 = vadd.f32 %v788, %v800
    %v802 = vpop.f32.mrf.mxu0
    %803 = vdwg.mxu0
    %804 = vmatpush.bf16.msra.mxu0 %v602
    %805 = vmatpush.bf16.msra.mxu0 %v598
    %806 = vmatpush.bf16.msra.mxu0 %v594
    %807 = vmatpush.bf16.msra.mxu0 %v590
    %808 = vmatpush.bf16.msra.mxu0 %v586
    %809 = vmatpush.bf16.msra.mxu0 %v582
    %810 = vmatpush.bf16.msra.mxu0 %v578
    %811 = vmatpush.bf16.msra.mxu0 %v574
    %812 = vmatmul.bf16.gmra.mxu0 %v113
    %v813 = vpop.f32.mrf.mxu0
    %v814 = vadd.f32 %v801, %v813
    %v815 = vpop.f32.mrf.mxu0
    %816 = vdwg.mxu0
    %817 = vmatpush.bf16.msra.mxu0 %v539
    %818 = vmatpush.bf16.msra.mxu0 %v535
    %819 = vmatpush.bf16.msra.mxu0 %v531
    %820 = vmatpush.bf16.msra.mxu0 %v527
    %821 = vmatpush.bf16.msra.mxu0 %v523
    %822 = vmatpush.bf16.msra.mxu0 %v519
    %823 = vmatpush.bf16.msra.mxu0 %v515
    %824 = vmatpush.bf16.msra.mxu0 %v511
    %825 = vmatmul.bf16.gmra.mxu0 %v111
    %v826 = vpop.f32.mrf.mxu0
    %v827 = vadd.f32 %v215, %v826
    %v828 = vpop.f32.mrf.mxu0
    %829 = vdwg.mxu0
    %830 = vmatpush.bf16.msra.mxu0 %v571
    %831 = vmatpush.bf16.msra.mxu0 %v567
    %832 = vmatpush.bf16.msra.mxu0 %v563
    %833 = vmatpush.bf16.msra.mxu0 %v559
    %834 = vmatpush.bf16.msra.mxu0 %v555
    %835 = vmatpush.bf16.msra.mxu0 %v551
    %836 = vmatpush.bf16.msra.mxu0 %v547
    %837 = vmatpush.bf16.msra.mxu0 %v543
    %838 = vmatmul.bf16.gmra.mxu0 %v112
    %v839 = vpop.f32.mrf.mxu0
    %v840 = vadd.f32 %v827, %v839
    %v841 = vpop.f32.mrf.mxu0
    %842 = vdwg.mxu0
    %843 = vmatpush.bf16.msra.mxu0 %v603
    %844 = vmatpush.bf16.msra.mxu0 %v599
    %845 = vmatpush.bf16.msra.mxu0 %v595
    %846 = vmatpush.bf16.msra.mxu0 %v591
    %847 = vmatpush.bf16.msra.mxu0 %v587
    %848 = vmatpush.bf16.msra.mxu0 %v583
    %849 = vmatpush.bf16.msra.mxu0 %v579
    %850 = vmatpush.bf16.msra.mxu0 %v575
    %851 = vmatmul.bf16.gmra.mxu0 %v113
    %v852 = vpop.f32.mrf.mxu0
    %v853 = vadd.f32 %v840, %v852
    %v854 = vpop.f32.mrf.mxu0
    %855 = vdwg.mxu0
    %v856 = vmax.f32 %v736, 0.0
    %v857 = vmax.f32 %v775, 0.0
    %v858 = vmax.f32 %v814, 0.0
    %v859 = vmax.f32 %v853, 0.0
    %v860 = vpack.c.bf16 %v856, %v856
    %v861 = vpack.c.bf16 %v857, %v857
    %v862 = vpack.c.bf16 %v858, %v858
    %v863 = vpack.c.bf16 %v859, %v859
    %v864 = vld [vmem:[%s5] sm:$0xff]
    %v865 = vld [vmem:[%s5 + $0x8] sm:$0xff]
    %v866 = vld [vmem:[%s5 + $0x10] sm:$0xff]
    %v867 = vld [vmem:[%s5 + $0x18] sm:$0xf]
    %v868 = vld [vmem:[%s5 + $0x1c] sm:$0xff]
    %v869 = vld [vmem:[%s5 + $0x24] sm:$0xff]
    %v870 = vld [vmem:[%s5 + $0x2c] sm:$0xff]
    %v871 = vld [vmem:[%s5 + $0x34] sm:$0xf]
    %v872 = vld [vmem:[%s5 + $0x38] sm:$0xff]
    %v873 = vld [vmem:[%s5 + $0x40] sm:$0xff]
    %v874 = vld [vmem:[%s5 + $0x48] sm:$0xff]
    %v875 = vld [vmem:[%s5 + $0x50] sm:$0xf]
    %v876 = vld [vmem:[%s5 + $0x54] sm:$0xff]
    %v877 = vld [vmem:[%s5 + $0x5c] sm:$0xff]
    %v878 = vld [vmem:[%s5 + $0x64] sm:$0xff]
    %v879 = vld [vmem:[%s5 + $0x6c] sm:$0xf]
    %v880 = vld [vmem:[%s5 + $0x70] sm:$0xff]
    %v881 = vld [vmem:[%s5 + $0x78] sm:$0xff]
    %v882 = vld [vmem:[%s5 + $0x80] sm:$0xff]
    %v883 = vld [vmem:[%s5 + $0x88] sm:$0xf]
    %v884 = vld [vmem:[%s5 + $0x8c] sm:$0xff]
    %v885 = vld [vmem:[%s5 + $0x94] sm:$0xff]
    %v886 = vld [vmem:[%s5 + $0x9c] sm:$0xff]
    %v887 = vld [vmem:[%s5 + $0xa4] sm:$0xf]
    %v888 = vld [vmem:[%s5 + $0xa8] sm:$0xff]
    %v889 = vld [vmem:[%s5 + $0xb0] sm:$0xff]
    %v890 = vld [vmem:[%s5 + $0xb8] sm:$0xff]
    %v891 = vld [vmem:[%s5 + $0xc0] sm:$0xf]
    %v892 = vld [vmem:[%s5 + $0xc4] sm:$0xff]
    %v893 = vld [vmem:[%s5 + $0xcc] sm:$0xff]
    %v894 = vld [vmem:[%s5 + $0xd4] sm:$0xff]
    %v895 = vld [vmem:[%s5 + $0xdc] sm:$0xf]
    %v896 = vld [vmem:[%s5 + $0xe0] sm:$0xff]
    %v897 = vld [vmem:[%s5 + $0xe8] sm:$0xff]
    %v898 = vld [vmem:[%s5 + $0xf0] sm:$0xff]
    %v899 = vld [vmem:[%s5 + $0xf8] sm:$0xf]
    %v900 = vld [vmem:[%s5 + $0xfc] sm:$0xff]
    %v901 = vld [vmem:[%s5 + $0x104] sm:$0xff]
    %v902 = vld [vmem:[%s5 + $0x10c] sm:$0xff]
    %v903 = vld [vmem:[%s5 + $0x114] sm:$0xf]
    %v904 = vld [vmem:[%s5 + $0x118] sm:$0xff]
    %v905 = vld [vmem:[%s5 + $0x120] sm:$0xff]
    %v906 = vld [vmem:[%s5 + $0x128] sm:$0xff]
    %v907 = vld [vmem:[%s5 + $0x130] sm:$0xf]
    %v908 = vld [vmem:[%s5 + $0x134] sm:$0xff]
    %v909 = vld [vmem:[%s5 + $0x13c] sm:$0xff]
    %v910 = vld [vmem:[%s5 + $0x144] sm:$0xff]
    %v911 = vld [vmem:[%s5 + $0x14c] sm:$0xf]
    %v912 = vld [vmem:[%s5 + $0x150] sm:$0xff]
    %v913 = vld [vmem:[%s5 + $0x158] sm:$0xff]
    %v914 = vld [vmem:[%s5 + $0x160] sm:$0xff]
    %v915 = vld [vmem:[%s5 + $0x168] sm:$0xf]
    %v916 = vld [vmem:[%s5 + $0x16c] sm:$0xff]
    %v917 = vld [vmem:[%s5 + $0x174] sm:$0xff]
    %v918 = vld [vmem:[%s5 + $0x17c] sm:$0xff]
    %v919 = vld [vmem:[%s5 + $0x184] sm:$0xf]
    %v920 = vld [vmem:[%s5 + $0x188] sm:$0xff]
    %v921 = vld [vmem:[%s5 + $0x190] sm:$0xff]
    %v922 = vld [vmem:[%s5 + $0x198] sm:$0xff]
    %v923 = vld [vmem:[%s5 + $0x1a0] sm:$0xf]
    %v924 = vld [vmem:[%s5 + $0x1a4] sm:$0xff]
    %v925 = vld [vmem:[%s5 + $0x1ac] sm:$0xff]
    %v926 = vld [vmem:[%s5 + $0x1b4] sm:$0xff]
    %v927 = vld [vmem:[%s5 + $0x1bc] sm:$0xf]
    %v928 = vld [vmem:[%s5 + $0x1c0] sm:$0xff]
    %v929 = vld [vmem:[%s5 + $0x1c8] sm:$0xff]
    %v930 = vld [vmem:[%s5 + $0x1d0] sm:$0xff]
    %v931 = vld [vmem:[%s5 + $0x1d8] sm:$0xf]
    %v932 = vld [vmem:[%s5 + $0x1dc] sm:$0xff]
    %v933 = vld [vmem:[%s5 + $0x1e4] sm:$0xff]
    %v934 = vld [vmem:[%s5 + $0x1ec] sm:$0xff]
    %v935 = vld [vmem:[%s5 + $0x1f4] sm:$0xf]
    %v936 = vld [vmem:[%s5 + $0x1f8] sm:$0xff]
    %v937 = vld [vmem:[%s5 + $0x200] sm:$0xff]
    %v938 = vld [vmem:[%s5 + $0x208] sm:$0xff]
    %v939 = vld [vmem:[%s5 + $0x210] sm:$0xf]
    %v940 = vld [vmem:[%s5 + $0x214] sm:$0xff]
    %v941 = vld [vmem:[%s5 + $0x21c] sm:$0xff]
    %v942 = vld [vmem:[%s5 + $0x224] sm:$0xff]
    %v943 = vld [vmem:[%s5 + $0x22c] sm:$0xf]
    %v944 = vld [vmem:[%s5 + $0x230] sm:$0xff]
    %v945 = vld [vmem:[%s5 + $0x238] sm:$0xff]
    %v946 = vld [vmem:[%s5 + $0x240] sm:$0xff]
    %v947 = vld [vmem:[%s5 + $0x248] sm:$0xf]
    %v948 = vld [vmem:[%s5 + $0x24c] sm:$0xff]
    %v949 = vld [vmem:[%s5 + $0x254] sm:$0xff]
    %v950 = vld [vmem:[%s5 + $0x25c] sm:$0xff]
    %v951 = vld [vmem:[%s5 + $0x264] sm:$0xf]
    %v952 = vld [vmem:[%s5 + $0x268] sm:$0xff]
    %v953 = vld [vmem:[%s5 + $0x270] sm:$0xff]
    %v954 = vld [vmem:[%s5 + $0x278] sm:$0xff]
    %v955 = vld [vmem:[%s5 + $0x280] sm:$0xf]
    %v956 = vld [vmem:[%s5 + $0x284] sm:$0xff]
    %v957 = vld [vmem:[%s5 + $0x28c] sm:$0xff]
    %v958 = vld [vmem:[%s5 + $0x294] sm:$0xff]
    %v959 = vld [vmem:[%s5 + $0x29c] sm:$0xf]
    %v960 = vld [vmem:[%s5 + $0x2a0] sm:$0xff]
    %v961 = vld [vmem:[%s5 + $0x2a8] sm:$0xff]
    %v962 = vld [vmem:[%s5 + $0x2b0] sm:$0xff]
    %v963 = vld [vmem:[%s5 + $0x2b8] sm:$0xf]
    %v964 = vld [vmem:[%s5 + $0x2bc] sm:$0xff]
    %v965 = vld [vmem:[%s5 + $0x2c4] sm:$0xff]
    %v966 = vld [vmem:[%s5 + $0x2cc] sm:$0xff]
    %v967 = vld [vmem:[%s5 + $0x2d4] sm:$0xf]
    %v968 = vld [vmem:[%s5 + $0x2d8] sm:$0xff]
    %v969 = vld [vmem:[%s5 + $0x2e0] sm:$0xff]
    %v970 = vld [vmem:[%s5 + $0x2e8] sm:$0xff]
    %v971 = vld [vmem:[%s5 + $0x2f0] sm:$0xf]
    %v972 = vld [vmem:[%s5 + $0x2f4] sm:$0xff]
    %v973 = vld [vmem:[%s5 + $0x2fc] sm:$0xff]
    %v974 = vld [vmem:[%s5 + $0x304] sm:$0xff]
    %v975 = vld [vmem:[%s5 + $0x30c] sm:$0xf]
    %v976 = vld [vmem:[%s5 + $0x310] sm:$0xff]
    %v977 = vld [vmem:[%s5 + $0x318] sm:$0xff]
    %v978 = vld [vmem:[%s5 + $0x320] sm:$0xff]
    %v979 = vld [vmem:[%s5 + $0x328] sm:$0xf]
    %v980 = vld [vmem:[%s5 + $0x32c] sm:$0xff]
    %v981 = vld [vmem:[%s5 + $0x334] sm:$0xff]
    %v982 = vld [vmem:[%s5 + $0x33c] sm:$0xff]
    %v983 = vld [vmem:[%s5 + $0x344] sm:$0xf]
    %v984 = vld [vmem:[%s5 + $0x348] sm:$0xff]
    %v985 = vld [vmem:[%s5 + $0x350] sm:$0xff]
    %v986 = vld [vmem:[%s5 + $0x358] sm:$0xff]
    %v987 = vld [vmem:[%s5 + $0x360] sm:$0xf]
    %v988 = vld [vmem:[%s5 + $0x364] sm:$0xff]
    %v989 = vld [vmem:[%s5 + $0x36c] sm:$0xff]
    %v990 = vld [vmem:[%s5 + $0x374] sm:$0xff]
    %v991 = vld [vmem:[%s5 + $0x37c] sm:$0xf]
    %v992 = vld [vmem:[%s5 + $0x380] sm:$0xff]
    %v993 = vld [vmem:[%s5 + $0x388] sm:$0xff]
    %v994 = vld [vmem:[%s5 + $0x390] sm:$0xff]
    %v995 = vld [vmem:[%s5 + $0x398] sm:$0xf]
    %v996 = vld [vmem:[%s5 + $0x39c] sm:$0xff]
    %v997 = vld [vmem:[%s5 + $0x3a4] sm:$0xff]
    %v998 = vld [vmem:[%s5 + $0x3ac] sm:$0xff]
    %v999 = vld [vmem:[%s5 + $0x3b4] sm:$0xf]
    %v1000 = vld [vmem:[%s5 + $0x3b8] sm:$0xff]
    %v1001 = vld [vmem:[%s5 + $0x3c0] sm:$0xff]
    %v1002 = vld [vmem:[%s5 + $0x3c8] sm:$0xff]
    %v1003 = vld [vmem:[%s5 + $0x3d0] sm:$0xf]
    %v1004 = vld [vmem:[%s5 + $0x3d4] sm:$0xff]
    %v1005 = vld [vmem:[%s5 + $0x3dc] sm:$0xff]
    %v1006 = vld [vmem:[%s5 + $0x3e4] sm:$0xff]
    %v1007 = vld [vmem:[%s5 + $0x3ec] sm:$0xf]
    %v1008 = vld [vmem:[%s5 + $0x3f0] sm:$0xff]
    %v1009 = vld [vmem:[%s5 + $0x3f8] sm:$0xff]
    %v1010 = vld [vmem:[%s5 + $0x400] sm:$0xff]
    %v1011 = vld [vmem:[%s5 + $0x408] sm:$0xf]
    %v1012 = vld [vmem:[%s5 + $0x40c] sm:$0xff]
    %v1013 = vld [vmem:[%s5 + $0x414] sm:$0xff]
    %v1014 = vld [vmem:[%s5 + $0x41c] sm:$0xff]
    %v1015 = vld [vmem:[%s5 + $0x424] sm:$0xf]
    %v1016 = vld [vmem:[%s5 + $0x428] sm:$0xff]
    %v1017 = vld [vmem:[%s5 + $0x430] sm:$0xff]
    %v1018 = vld [vmem:[%s5 + $0x438] sm:$0xff]
    %v1019 = vld [vmem:[%s5 + $0x440] sm:$0xf]
    %v1020 = vld [vmem:[%s5 + $0x444] sm:$0xff]
    %v1021 = vld [vmem:[%s5 + $0x44c] sm:$0xff]
    %v1022 = vld [vmem:[%s5 + $0x454] sm:$0xff]
    %v1023 = vld [vmem:[%s5 + $0x45c] sm:$0xf]
    %v1024 = vld [vmem:[%s5 + $0x460] sm:$0xff]
    %v1025 = vld [vmem:[%s5 + $0x468] sm:$0xff]
    %v1026 = vld [vmem:[%s5 + $0x470] sm:$0xff]
    %v1027 = vld [vmem:[%s5 + $0x478] sm:$0xf]
    %v1028 = vld [vmem:[%s5 + $0x47c] sm:$0xff]
    %v1029 = vld [vmem:[%s5 + $0x484] sm:$0xff]
    %v1030 = vld [vmem:[%s5 + $0x48c] sm:$0xff]
    %v1031 = vld [vmem:[%s5 + $0x494] sm:$0xf]
    %v1032 = vld [vmem:[%s5 + $0x498] sm:$0xff]
    %v1033 = vld [vmem:[%s5 + $0x4a0] sm:$0xff]
    %v1034 = vld [vmem:[%s5 + $0x4a8] sm:$0xff]
    %v1035 = vld [vmem:[%s5 + $0x4b0] sm:$0xf]
    %v1036 = vld [vmem:[%s5 + $0x4b4] sm:$0xff]
    %v1037 = vld [vmem:[%s5 + $0x4bc] sm:$0xff]
    %v1038 = vld [vmem:[%s5 + $0x4c4] sm:$0xff]
    %v1039 = vld [vmem:[%s5 + $0x4cc] sm:$0xf]
    %v1040 = vld [vmem:[%s5 + $0x4d0] sm:$0xff]
    %v1041 = vld [vmem:[%s5 + $0x4d8] sm:$0xff]
    %v1042 = vld [vmem:[%s5 + $0x4e0] sm:$0xff]
    %v1043 = vld [vmem:[%s5 + $0x4e8] sm:$0xf]
    %v1044 = vld [vmem:[%s5 + $0x4ec] sm:$0xff]
    %v1045 = vld [vmem:[%s5 + $0x4f4] sm:$0xff]
    %v1046 = vld [vmem:[%s5 + $0x4fc] sm:$0xff]
    %v1047 = vld [vmem:[%s5 + $0x504] sm:$0xf]
    %v1048 = vld [vmem:[%s5 + $0x508] sm:$0xff]
    %v1049 = vld [vmem:[%s5 + $0x510] sm:$0xff]
    %v1050 = vld [vmem:[%s5 + $0x518] sm:$0xff]
    %v1051 = vld [vmem:[%s5 + $0x520] sm:$0xf]
    %v1052 = vld [vmem:[%s5 + $0x524] sm:$0xff]
    %v1053 = vld [vmem:[%s5 + $0x52c] sm:$0xff]
    %v1054 = vld [vmem:[%s5 + $0x534] sm:$0xff]
    %v1055 = vld [vmem:[%s5 + $0x53c] sm:$0xf]
    %v1056 = vld [vmem:[%s5 + $0x540] sm:$0xff]
    %v1057 = vld [vmem:[%s5 + $0x548] sm:$0xff]
    %v1058 = vld [vmem:[%s5 + $0x550] sm:$0xff]
    %v1059 = vld [vmem:[%s5 + $0x558] sm:$0xf]
    %v1060 = vld [vmem:[%s5 + $0x55c] sm:$0xff]
    %v1061 = vld [vmem:[%s5 + $0x564] sm:$0xff]
    %v1062 = vld [vmem:[%s5 + $0x56c] sm:$0xff]
    %v1063 = vld [vmem:[%s5 + $0x574] sm:$0xf]
    %v1064 = vld [vmem:[%s5 + $0x578] sm:$0xff]
    %v1065 = vld [vmem:[%s5 + $0x580] sm:$0xff]
    %v1066 = vld [vmem:[%s5 + $0x588] sm:$0xff]
    %v1067 = vld [vmem:[%s5 + $0x590] sm:$0xf]
    %v1068 = vld [vmem:[%s5 + $0x594] sm:$0xff]
    %v1069 = vld [vmem:[%s5 + $0x59c] sm:$0xff]
    %v1070 = vld [vmem:[%s5 + $0x5a4] sm:$0xff]
    %v1071 = vld [vmem:[%s5 + $0x5ac] sm:$0xf]
    %v1072 = vld [vmem:[%s5 + $0x5b0] sm:$0xff]
    %v1073 = vld [vmem:[%s5 + $0x5b8] sm:$0xff]
    %v1074 = vld [vmem:[%s5 + $0x5c0] sm:$0xff]
    %v1075 = vld [vmem:[%s5 + $0x5c8] sm:$0xf]
    %v1076 = vld [vmem:[%s5 + $0x5cc] sm:$0xff]
    %v1077 = vld [vmem:[%s5 + $0x5d4] sm:$0xff]
    %v1078 = vld [vmem:[%s5 + $0x5dc] sm:$0xff]
    %v1079 = vld [vmem:[%s5 + $0x5e4] sm:$0xf]
    %v1080 = vld [vmem:[%s5 + $0x5e8] sm:$0xff]
    %v1081 = vld [vmem:[%s5 + $0x5f0] sm:$0xff]
    %v1082 = vld [vmem:[%s5 + $0x5f8] sm:$0xff]
    %v1083 = vld [vmem:[%s5 + $0x600] sm:$0xf]
    %v1084 = vld [vmem:[%s5 + $0x604] sm:$0xff]
    %v1085 = vld [vmem:[%s5 + $0x60c] sm:$0xff]
    %v1086 = vld [vmem:[%s5 + $0x614] sm:$0xff]
    %v1087 = vld [vmem:[%s5 + $0x61c] sm:$0xf]
    %v1088 = vld [vmem:[%s5 + $0x620] sm:$0xff]
    %v1089 = vld [vmem:[%s5 + $0x628] sm:$0xff]
    %v1090 = vld [vmem:[%s5 + $0x630] sm:$0xff]
    %v1091 = vld [vmem:[%s5 + $0x638] sm:$0xf]
    %v1092 = vld [vmem:[%s5 + $0x63c] sm:$0xff]
    %v1093 = vld [vmem:[%s5 + $0x644] sm:$0xff]
    %v1094 = vld [vmem:[%s5 + $0x64c] sm:$0xff]
    %v1095 = vld [vmem:[%s5 + $0x654] sm:$0xf]
    %v1096 = vld [vmem:[%s5 + $0x658] sm:$0xff]
    %v1097 = vld [vmem:[%s5 + $0x660] sm:$0xff]
    %v1098 = vld [vmem:[%s5 + $0x668] sm:$0xff]
    %v1099 = vld [vmem:[%s5 + $0x670] sm:$0xf]
    %v1100 = vld [vmem:[%s5 + $0x674] sm:$0xff]
    %v1101 = vld [vmem:[%s5 + $0x67c] sm:$0xff]
    %v1102 = vld [vmem:[%s5 + $0x684] sm:$0xff]
    %v1103 = vld [vmem:[%s5 + $0x68c] sm:$0xf]
    %v1104 = vld [vmem:[%s5 + $0x690] sm:$0xff]
    %v1105 = vld [vmem:[%s5 + $0x698] sm:$0xff]
    %v1106 = vld [vmem:[%s5 + $0x6a0] sm:$0xff]
    %v1107 = vld [vmem:[%s5 + $0x6a8] sm:$0xf]
    %v1108 = vld [vmem:[%s5 + $0x6ac] sm:$0xff]
    %v1109 = vld [vmem:[%s5 + $0x6b4] sm:$0xff]
    %v1110 = vld [vmem:[%s5 + $0x6bc] sm:$0xff]
    %v1111 = vld [vmem:[%s5 + $0x6c4] sm:$0xf]
    %v1112 = vld [vmem:[%s5 + $0x6c8] sm:$0xff]
    %v1113 = vld [vmem:[%s5 + $0x6d0] sm:$0xff]
    %v1114 = vld [vmem:[%s5 + $0x6d8] sm:$0xff]
    %v1115 = vld [vmem:[%s5 + $0x6e0] sm:$0xf]
    %v1116 = vld [vmem:[%s5 + $0x6e4] sm:$0xff]
    %v1117 = vld [vmem:[%s5 + $0x6ec] sm:$0xff]
    %v1118 = vld [vmem:[%s5 + $0x6f4] sm:$0xff]
    %v1119 = vld [vmem:[%s5 + $0x6fc] sm:$0xf]
    %v1120 = vld [vmem:[%s6] sm:$0x7f]
    %v1122 = vperm.slane %v1120, 0
    %v1123 = vperm.slane %v1120, 1
    %v1124 = vperm.slane %v1120, 2
    %v1125 = vperm.slane %v1120, 3
    %v1126 = vperm.slane %v1120, 4
    %v1127 = vperm.slane %v1120, 5
    %v1128 = vperm.slane %v1120, 6
    %v1392 = vunpack.c.l.b16 %v864
    %v1393 = vunpack.c.h.b16 %v864
    %v1394 = vunpack.c.l.b16 %v865
    %v1395 = vunpack.c.h.b16 %v865
    %v1396 = vunpack.c.l.b16 %v866
    %v1397 = vunpack.c.h.b16 %v866
    %v1398 = vunpack.c.l.b16 %v867
    %v1399 = vunpack.c.l.b16 %v868
    %v1400 = vunpack.c.h.b16 %v868
    %v1401 = vunpack.c.l.b16 %v869
    %v1402 = vunpack.c.h.b16 %v869
    %v1403 = vunpack.c.l.b16 %v870
    %v1404 = vunpack.c.h.b16 %v870
    %v1405 = vunpack.c.l.b16 %v871
    %v1406 = vunpack.c.l.b16 %v872
    %v1407 = vunpack.c.h.b16 %v872
    %v1408 = vunpack.c.l.b16 %v873
    %v1409 = vunpack.c.h.b16 %v873
    %v1410 = vunpack.c.l.b16 %v874
    %v1411 = vunpack.c.h.b16 %v874
    %v1412 = vunpack.c.l.b16 %v875
    %v1413 = vunpack.c.l.b16 %v876
    %v1414 = vunpack.c.h.b16 %v876
    %v1415 = vunpack.c.l.b16 %v877
    %v1416 = vunpack.c.h.b16 %v877
    %v1417 = vunpack.c.l.b16 %v878
    %v1418 = vunpack.c.h.b16 %v878
    %v1419 = vunpack.c.l.b16 %v879
    %v1420 = vunpack.c.l.b16 %v880
    %v1421 = vunpack.c.h.b16 %v880
    %v1422 = vunpack.c.l.b16 %v881
    %v1423 = vunpack.c.h.b16 %v881
    %v1424 = vunpack.c.l.b16 %v882
    %v1425 = vunpack.c.h.b16 %v882
    %v1426 = vunpack.c.l.b16 %v883
    %v1427 = vunpack.c.l.b16 %v884
    %v1428 = vunpack.c.h.b16 %v884
    %v1429 = vunpack.c.l.b16 %v885
    %v1430 = vunpack.c.h.b16 %v885
    %v1431 = vunpack.c.l.b16 %v886
    %v1432 = vunpack.c.h.b16 %v886
    %v1433 = vunpack.c.l.b16 %v887
    %v1434 = vunpack.c.l.b16 %v888
    %v1435 = vunpack.c.h.b16 %v888
    %v1436 = vunpack.c.l.b16 %v889
    %v1437 = vunpack.c.h.b16 %v889
    %v1438 = vunpack.c.l.b16 %v890
    %v1439 = vunpack.c.h.b16 %v890
    %v1440 = vunpack.c.l.b16 %v891
    %v1441 = vunpack.c.l.b16 %v892
    %v1442 = vunpack.c.h.b16 %v892
    %v1443 = vunpack.c.l.b16 %v893
    %v1444 = vunpack.c.h.b16 %v893
    %v1445 = vunpack.c.l.b16 %v894
    %v1446 = vunpack.c.h.b16 %v894
    %v1447 = vunpack.c.l.b16 %v895
    %v1448 = vunpack.c.l.b16 %v896
    %v1449 = vunpack.c.h.b16 %v896
    %v1450 = vunpack.c.l.b16 %v897
    %v1451 = vunpack.c.h.b16 %v897
    %v1452 = vunpack.c.l.b16 %v898
    %v1453 = vunpack.c.h.b16 %v898
    %v1454 = vunpack.c.l.b16 %v899
    %v1455 = vunpack.c.l.b16 %v900
    %v1456 = vunpack.c.h.b16 %v900
    %v1457 = vunpack.c.l.b16 %v901
    %v1458 = vunpack.c.h.b16 %v901
    %v1459 = vunpack.c.l.b16 %v902
    %v1460 = vunpack.c.h.b16 %v902
    %v1461 = vunpack.c.l.b16 %v903
    %v1462 = vunpack.c.l.b16 %v904
    %v1463 = vunpack.c.h.b16 %v904
    %v1464 = vunpack.c.l.b16 %v905
    %v1465 = vunpack.c.h.b16 %v905
    %v1466 = vunpack.c.l.b16 %v906
    %v1467 = vunpack.c.h.b16 %v906
    %v1468 = vunpack.c.l.b16 %v907
    %v1469 = vunpack.c.l.b16 %v908
    %v1470 = vunpack.c.h.b16 %v908
    %v1471 = vunpack.c.l.b16 %v909
    %v1472 = vunpack.c.h.b16 %v909
    %v1473 = vunpack.c.l.b16 %v910
    %v1474 = vunpack.c.h.b16 %v910
    %v1475 = vunpack.c.l.b16 %v911
    %v1476 = vunpack.c.l.b16 %v912
    %v1477 = vunpack.c.h.b16 %v912
    %v1478 = vunpack.c.l.b16 %v913
    %v1479 = vunpack.c.h.b16 %v913
    %v1480 = vunpack.c.l.b16 %v914
    %v1481 = vunpack.c.h.b16 %v914
    %v1482 = vunpack.c.l.b16 %v915
    %v1483 = vunpack.c.l.b16 %v916
    %v1484 = vunpack.c.h.b16 %v916
    %v1485 = vunpack.c.l.b16 %v917
    %v1486 = vunpack.c.h.b16 %v917
    %v1487 = vunpack.c.l.b16 %v918
    %v1488 = vunpack.c.h.b16 %v918
    %v1489 = vunpack.c.l.b16 %v919
    %v1490 = vunpack.c.l.b16 %v920
    %v1491 = vunpack.c.h.b16 %v920
    %v1492 = vunpack.c.l.b16 %v921
    %v1493 = vunpack.c.h.b16 %v921
    %v1494 = vunpack.c.l.b16 %v922
    %v1495 = vunpack.c.h.b16 %v922
    %v1496 = vunpack.c.l.b16 %v923
    %v1497 = vunpack.c.l.b16 %v924
    %v1498 = vunpack.c.h.b16 %v924
    %v1499 = vunpack.c.l.b16 %v925
    %v1500 = vunpack.c.h.b16 %v925
    %v1501 = vunpack.c.l.b16 %v926
    %v1502 = vunpack.c.h.b16 %v926
    %v1503 = vunpack.c.l.b16 %v927
    %v1504 = vunpack.c.l.b16 %v928
    %v1505 = vunpack.c.h.b16 %v928
    %v1506 = vunpack.c.l.b16 %v929
    %v1507 = vunpack.c.h.b16 %v929
    %v1508 = vunpack.c.l.b16 %v930
    %v1509 = vunpack.c.h.b16 %v930
    %v1510 = vunpack.c.l.b16 %v931
    %v1511 = vunpack.c.l.b16 %v932
    %v1512 = vunpack.c.h.b16 %v932
    %v1513 = vunpack.c.l.b16 %v933
    %v1514 = vunpack.c.h.b16 %v933
    %v1515 = vunpack.c.l.b16 %v934
    %v1516 = vunpack.c.h.b16 %v934
    %v1517 = vunpack.c.l.b16 %v935
    %v1518 = vunpack.c.l.b16 %v936
    %v1519 = vunpack.c.h.b16 %v936
    %v1520 = vunpack.c.l.b16 %v937
    %v1521 = vunpack.c.h.b16 %v937
    %v1522 = vunpack.c.l.b16 %v938
    %v1523 = vunpack.c.h.b16 %v938
    %v1524 = vunpack.c.l.b16 %v939
    %v1525 = vunpack.c.l.b16 %v940
    %v1526 = vunpack.c.h.b16 %v940
    %v1527 = vunpack.c.l.b16 %v941
    %v1528 = vunpack.c.h.b16 %v941
    %v1529 = vunpack.c.l.b16 %v942
    %v1530 = vunpack.c.h.b16 %v942
    %v1531 = vunpack.c.l.b16 %v943
    %v1532 = vunpack.c.l.b16 %v944
    %v1533 = vunpack.c.h.b16 %v944
    %v1534 = vunpack.c.l.b16 %v945
    %v1535 = vunpack.c.h.b16 %v945
    %v1536 = vunpack.c.l.b16 %v946
    %v1537 = vunpack.c.h.b16 %v946
    %v1538 = vunpack.c.l.b16 %v947
    %v1539 = vunpack.c.l.b16 %v948
    %v1540 = vunpack.c.h.b16 %v948
    %v1541 = vunpack.c.l.b16 %v949
    %v1542 = vunpack.c.h.b16 %v949
    %v1543 = vunpack.c.l.b16 %v950
    %v1544 = vunpack.c.h.b16 %v950
    %v1545 = vunpack.c.l.b16 %v951
    %v1546 = vunpack.c.l.b16 %v952
    %v1547 = vunpack.c.h.b16 %v952
    %v1548 = vunpack.c.l.b16 %v953
    %v1549 = vunpack.c.h.b16 %v953
    %v1550 = vunpack.c.l.b16 %v954
    %v1551 = vunpack.c.h.b16 %v954
    %v1552 = vunpack.c.l.b16 %v955
    %v1553 = vunpack.c.l.b16 %v956
    %v1554 = vunpack.c.h.b16 %v956
    %v1555 = vunpack.c.l.b16 %v957
    %v1556 = vunpack.c.h.b16 %v957
    %v1557 = vunpack.c.l.b16 %v958
    %v1558 = vunpack.c.h.b16 %v958
    %v1559 = vunpack.c.l.b16 %v959
    %v1560 = vunpack.c.l.b16 %v960
    %v1561 = vunpack.c.h.b16 %v960
    %v1562 = vunpack.c.l.b16 %v961
    %v1563 = vunpack.c.h.b16 %v961
    %v1564 = vunpack.c.l.b16 %v962
    %v1565 = vunpack.c.h.b16 %v962
    %v1566 = vunpack.c.l.b16 %v963
    %v1567 = vunpack.c.l.b16 %v964
    %v1568 = vunpack.c.h.b16 %v964
    %v1569 = vunpack.c.l.b16 %v965
    %v1570 = vunpack.c.h.b16 %v965
    %v1571 = vunpack.c.l.b16 %v966
    %v1572 = vunpack.c.h.b16 %v966
    %v1573 = vunpack.c.l.b16 %v967
    %v1574 = vunpack.c.l.b16 %v968
    %v1575 = vunpack.c.h.b16 %v968
    %v1576 = vunpack.c.l.b16 %v969
    %v1577 = vunpack.c.h.b16 %v969
    %v1578 = vunpack.c.l.b16 %v970
    %v1579 = vunpack.c.h.b16 %v970
    %v1580 = vunpack.c.l.b16 %v971
    %v1581 = vunpack.c.l.b16 %v972
    %v1582 = vunpack.c.h.b16 %v972
    %v1583 = vunpack.c.l.b16 %v973
    %v1584 = vunpack.c.h.b16 %v973
    %v1585 = vunpack.c.l.b16 %v974
    %v1586 = vunpack.c.h.b16 %v974
    %v1587 = vunpack.c.l.b16 %v975
    %v1588 = vunpack.c.l.b16 %v976
    %v1589 = vunpack.c.h.b16 %v976
    %v1590 = vunpack.c.l.b16 %v977
    %v1591 = vunpack.c.h.b16 %v977
    %v1592 = vunpack.c.l.b16 %v978
    %v1593 = vunpack.c.h.b16 %v978
    %v1594 = vunpack.c.l.b16 %v979
    %v1595 = vunpack.c.l.b16 %v980
    %v1596 = vunpack.c.h.b16 %v980
    %v1597 = vunpack.c.l.b16 %v981
    %v1598 = vunpack.c.h.b16 %v981
    %v1599 = vunpack.c.l.b16 %v982
    %v1600 = vunpack.c.h.b16 %v982
    %v1601 = vunpack.c.l.b16 %v983
    %v1602 = vunpack.c.l.b16 %v984
    %v1603 = vunpack.c.h.b16 %v984
    %v1604 = vunpack.c.l.b16 %v985
    %v1605 = vunpack.c.h.b16 %v985
    %v1606 = vunpack.c.l.b16 %v986
    %v1607 = vunpack.c.h.b16 %v986
    %v1608 = vunpack.c.l.b16 %v987
    %v1609 = vunpack.c.l.b16 %v988
    %v1610 = vunpack.c.h.b16 %v988
    %v1611 = vunpack.c.l.b16 %v989
    %v1612 = vunpack.c.h.b16 %v989
    %v1613 = vunpack.c.l.b16 %v990
    %v1614 = vunpack.c.h.b16 %v990
    %v1615 = vunpack.c.l.b16 %v991
    %v1616 = vunpack.c.l.b16 %v992
    %v1617 = vunpack.c.h.b16 %v992
    %v1618 = vunpack.c.l.b16 %v993
    %v1619 = vunpack.c.h.b16 %v993
    %v1620 = vunpack.c.l.b16 %v994
    %v1621 = vunpack.c.h.b16 %v994
    %v1622 = vunpack.c.l.b16 %v995
    %v1623 = vunpack.c.l.b16 %v996
    %v1624 = vunpack.c.h.b16 %v996
    %v1625 = vunpack.c.l.b16 %v997
    %v1626 = vunpack.c.h.b16 %v997
    %v1627 = vunpack.c.l.b16 %v998
    %v1628 = vunpack.c.h.b16 %v998
    %v1629 = vunpack.c.l.b16 %v999
    %v1630 = vunpack.c.l.b16 %v1000
    %v1631 = vunpack.c.h.b16 %v1000
    %v1632 = vunpack.c.l.b16 %v1001
    %v1633 = vunpack.c.h.b16 %v1001
    %v1634 = vunpack.c.l.b16 %v1002
    %v1635 = vunpack.c.h.b16 %v1002
    %v1636 = vunpack.c.l.b16 %v1003
    %v1637 = vunpack.c.l.b16 %v1004
    %v1638 = vunpack.c.h.b16 %v1004
    %v1639 = vunpack.c.l.b16 %v1005
    %v1640 = vunpack.c.h.b16 %v1005
    %v1641 = vunpack.c.l.b16 %v1006
    %v1642 = vunpack.c.h.b16 %v1006
    %v1643 = vunpack.c.l.b16 %v1007
    %v1644 = vunpack.c.l.b16 %v1008
    %v1645 = vunpack.c.h.b16 %v1008
    %v1646 = vunpack.c.l.b16 %v1009
    %v1647 = vunpack.c.h.b16 %v1009
    %v1648 = vunpack.c.l.b16 %v1010
    %v1649 = vunpack.c.h.b16 %v1010
    %v1650 = vunpack.c.l.b16 %v1011
    %v1651 = vunpack.c.l.b16 %v1012
    %v1652 = vunpack.c.h.b16 %v1012
    %v1653 = vunpack.c.l.b16 %v1013
    %v1654 = vunpack.c.h.b16 %v1013
    %v1655 = vunpack.c.l.b16 %v1014
    %v1656 = vunpack.c.h.b16 %v1014
    %v1657 = vunpack.c.l.b16 %v1015
    %v1658 = vunpack.c.l.b16 %v1016
    %v1659 = vunpack.c.h.b16 %v1016
    %v1660 = vunpack.c.l.b16 %v1017
    %v1661 = vunpack.c.h.b16 %v1017
    %v1662 = vunpack.c.l.b16 %v1018
    %v1663 = vunpack.c.h.b16 %v1018
    %v1664 = vunpack.c.l.b16 %v1019
    %v1665 = vunpack.c.l.b16 %v1020
    %v1666 = vunpack.c.h.b16 %v1020
    %v1667 = vunpack.c.l.b16 %v1021
    %v1668 = vunpack.c.h.b16 %v1021
    %v1669 = vunpack.c.l.b16 %v1022
    %v1670 = vunpack.c.h.b16 %v1022
    %v1671 = vunpack.c.l.b16 %v1023
    %v1672 = vunpack.c.l.b16 %v1024
    %v1673 = vunpack.c.h.b16 %v1024
    %v1674 = vunpack.c.l.b16 %v1025
    %v1675 = vunpack.c.h.b16 %v1025
    %v1676 = vunpack.c.l.b16 %v1026
    %v1677 = vunpack.c.h.b16 %v1026
    %v1678 = vunpack.c.l.b16 %v1027
    %v1679 = vunpack.c.l.b16 %v1028
    %v1680 = vunpack.c.h.b16 %v1028
    %v1681 = vunpack.c.l.b16 %v1029
    %v1682 = vunpack.c.h.b16 %v1029
    %v1683 = vunpack.c.l.b16 %v1030
    %v1684 = vunpack.c.h.b16 %v1030
    %v1685 = vunpack.c.l.b16 %v1031
    %v1686 = vunpack.c.l.b16 %v1032
    %v1687 = vunpack.c.h.b16 %v1032
    %v1688 = vunpack.c.l.b16 %v1033
    %v1689 = vunpack.c.h.b16 %v1033
    %v1690 = vunpack.c.l.b16 %v1034
    %v1691 = vunpack.c.h.b16 %v1034
    %v1692 = vunpack.c.l.b16 %v1035
    %v1693 = vunpack.c.l.b16 %v1036
    %v1694 = vunpack.c.h.b16 %v1036
    %v1695 = vunpack.c.l.b16 %v1037
    %v1696 = vunpack.c.h.b16 %v1037
    %v1697 = vunpack.c.l.b16 %v1038
    %v1698 = vunpack.c.h.b16 %v1038
    %v1699 = vunpack.c.l.b16 %v1039
    %v1700 = vunpack.c.l.b16 %v1040
    %v1701 = vunpack.c.h.b16 %v1040
    %v1702 = vunpack.c.l.b16 %v1041
    %v1703 = vunpack.c.h.b16 %v1041
    %v1704 = vunpack.c.l.b16 %v1042
    %v1705 = vunpack.c.h.b16 %v1042
    %v1706 = vunpack.c.l.b16 %v1043
    %v1707 = vunpack.c.l.b16 %v1044
    %v1708 = vunpack.c.h.b16 %v1044
    %v1709 = vunpack.c.l.b16 %v1045
    %v1710 = vunpack.c.h.b16 %v1045
    %v1711 = vunpack.c.l.b16 %v1046
    %v1712 = vunpack.c.h.b16 %v1046
    %v1713 = vunpack.c.l.b16 %v1047
    %v1714 = vunpack.c.l.b16 %v1048
    %v1715 = vunpack.c.h.b16 %v1048
    %v1716 = vunpack.c.l.b16 %v1049
    %v1717 = vunpack.c.h.b16 %v1049
    %v1718 = vunpack.c.l.b16 %v1050
    %v1719 = vunpack.c.h.b16 %v1050
    %v1720 = vunpack.c.l.b16 %v1051
    %v1721 = vunpack.c.l.b16 %v1052
    %v1722 = vunpack.c.h.b16 %v1052
    %v1723 = vunpack.c.l.b16 %v1053
    %v1724 = vunpack.c.h.b16 %v1053
    %v1725 = vunpack.c.l.b16 %v1054
    %v1726 = vunpack.c.h.b16 %v1054
    %v1727 = vunpack.c.l.b16 %v1055
    %v1728 = vunpack.c.l.b16 %v1056
    %v1729 = vunpack.c.h.b16 %v1056
    %v1730 = vunpack.c.l.b16 %v1057
    %v1731 = vunpack.c.h.b16 %v1057
    %v1732 = vunpack.c.l.b16 %v1058
    %v1733 = vunpack.c.h.b16 %v1058
    %v1734 = vunpack.c.l.b16 %v1059
    %v1735 = vunpack.c.l.b16 %v1060
    %v1736 = vunpack.c.h.b16 %v1060
    %v1737 = vunpack.c.l.b16 %v1061
    %v1738 = vunpack.c.h.b16 %v1061
    %v1739 = vunpack.c.l.b16 %v1062
    %v1740 = vunpack.c.h.b16 %v1062
    %v1741 = vunpack.c.l.b16 %v1063
    %v1742 = vunpack.c.l.b16 %v1064
    %v1743 = vunpack.c.h.b16 %v1064
    %v1744 = vunpack.c.l.b16 %v1065
    %v1745 = vunpack.c.h.b16 %v1065
    %v1746 = vunpack.c.l.b16 %v1066
    %v1747 = vunpack.c.h.b16 %v1066
    %v1748 = vunpack.c.l.b16 %v1067
    %v1749 = vunpack.c.l.b16 %v1068
    %v1750 = vunpack.c.h.b16 %v1068
    %v1751 = vunpack.c.l.b16 %v1069
    %v1752 = vunpack.c.h.b16 %v1069
    %v1753 = vunpack.c.l.b16 %v1070
    %v1754 = vunpack.c.h.b16 %v1070
    %v1755 = vunpack.c.l.b16 %v1071
    %v1756 = vunpack.c.l.b16 %v1072
    %v1757 = vunpack.c.h.b16 %v1072
    %v1758 = vunpack.c.l.b16 %v1073
    %v1759 = vunpack.c.h.b16 %v1073
    %v1760 = vunpack.c.l.b16 %v1074
    %v1761 = vunpack.c.h.b16 %v1074
    %v1762 = vunpack.c.l.b16 %v1075
    %v1763 = vunpack.c.l.b16 %v1076
    %v1764 = vunpack.c.h.b16 %v1076
    %v1765 = vunpack.c.l.b16 %v1077
    %v1766 = vunpack.c.h.b16 %v1077
    %v1767 = vunpack.c.l.b16 %v1078
    %v1768 = vunpack.c.h.b16 %v1078
    %v1769 = vunpack.c.l.b16 %v1079
    %v1770 = vunpack.c.l.b16 %v1080
    %v1771 = vunpack.c.h.b16 %v1080
    %v1772 = vunpack.c.l.b16 %v1081
    %v1773 = vunpack.c.h.b16 %v1081
    %v1774 = vunpack.c.l.b16 %v1082
    %v1775 = vunpack.c.h.b16 %v1082
    %v1776 = vunpack.c.l.b16 %v1083
    %v1777 = vunpack.c.l.b16 %v1084
    %v1778 = vunpack.c.h.b16 %v1084
    %v1779 = vunpack.c.l.b16 %v1085
    %v1780 = vunpack.c.h.b16 %v1085
    %v1781 = vunpack.c.l.b16 %v1086
    %v1782 = vunpack.c.h.b16 %v1086
    %v1783 = vunpack.c.l.b16 %v1087
    %v1784 = vunpack.c.l.b16 %v1088
    %v1785 = vunpack.c.h.b16 %v1088
    %v1786 = vunpack.c.l.b16 %v1089
    %v1787 = vunpack.c.h.b16 %v1089
    %v1788 = vunpack.c.l.b16 %v1090
    %v1789 = vunpack.c.h.b16 %v1090
    %v1790 = vunpack.c.l.b16 %v1091
    %v1791 = vunpack.c.l.b16 %v1092
    %v1792 = vunpack.c.h.b16 %v1092
    %v1793 = vunpack.c.l.b16 %v1093
    %v1794 = vunpack.c.h.b16 %v1093
    %v1795 = vunpack.c.l.b16 %v1094
    %v1796 = vunpack.c.h.b16 %v1094
    %v1797 = vunpack.c.l.b16 %v1095
    %v1798 = vunpack.c.l.b16 %v1096
    %v1799 = vunpack.c.h.b16 %v1096
    %v1800 = vunpack.c.l.b16 %v1097
    %v1801 = vunpack.c.h.b16 %v1097
    %v1802 = vunpack.c.l.b16 %v1098
    %v1803 = vunpack.c.h.b16 %v1098
    %v1804 = vunpack.c.l.b16 %v1099
    %v1805 = vunpack.c.l.b16 %v1100
    %v1806 = vunpack.c.h.b16 %v1100
    %v1807 = vunpack.c.l.b16 %v1101
    %v1808 = vunpack.c.h.b16 %v1101
    %v1809 = vunpack.c.l.b16 %v1102
    %v1810 = vunpack.c.h.b16 %v1102
    %v1811 = vunpack.c.l.b16 %v1103
    %v1812 = vunpack.c.l.b16 %v1104
    %v1813 = vunpack.c.h.b16 %v1104
    %v1814 = vunpack.c.l.b16 %v1105
    %v1815 = vunpack.c.h.b16 %v1105
    %v1816 = vunpack.c.l.b16 %v1106
    %v1817 = vunpack.c.h.b16 %v1106
    %v1818 = vunpack.c.l.b16 %v1107
    %v1819 = vunpack.c.l.b16 %v1108
    %v1820 = vunpack.c.h.b16 %v1108
    %v1821 = vunpack.c.l.b16 %v1109
    %v1822 = vunpack.c.h.b16 %v1109
    %v1823 = vunpack.c.l.b16 %v1110
    %v1824 = vunpack.c.h.b16 %v1110
    %v1825 = vunpack.c.l.b16 %v1111
    %v1826 = vunpack.c.l.b16 %v1112
    %v1827 = vunpack.c.h.b16 %v1112
    %v1828 = vunpack.c.l.b16 %v1113
    %v1829 = vunpack.c.h.b16 %v1113
    %v1830 = vunpack.c.l.b16 %v1114
    %v1831 = vunpack.c.h.b16 %v1114
    %v1832 = vunpack.c.l.b16 %v1115
    %v1833 = vunpack.c.l.b16 %v1116
    %v1834 = vunpack.c.h.b16 %v1116
    %v1835 = vunpack.c.l.b16 %v1117
    %v1836 = vunpack.c.h.b16 %v1117
    %v1837 = vunpack.c.l.b16 %v1118
    %v1838 = vunpack.c.h.b16 %v1118
    %v1839 = vunpack.c.l.b16 %v1119
    %v1840 = vpack.c.b16 %v1399, %v1392
    %v1841 = vpack.c.b16 %v1400, %v1393
    %v1842 = vpack.c.b16 %v1401, %v1394
    %v1843 = vpack.c.b16 %v1402, %v1395
    %v1844 = vpack.c.b16 %v1403, %v1396
    %v1845 = vpack.c.b16 %v1404, %v1397
    %v1846 = vpack.c.b16 %v1405, %v1398
    %v1847 = vpack.c.b16 %v1413, %v1406
    %v1848 = vpack.c.b16 %v1414, %v1407
    %v1849 = vpack.c.b16 %v1415, %v1408
    %v1850 = vpack.c.b16 %v1416, %v1409
    %v1851 = vpack.c.b16 %v1417, %v1410
    %v1852 = vpack.c.b16 %v1418, %v1411
    %v1853 = vpack.c.b16 %v1419, %v1412
    %v1854 = vpack.c.b16 %v1427, %v1420
    %v1855 = vpack.c.b16 %v1428, %v1421
    %v1856 = vpack.c.b16 %v1429, %v1422
    %v1857 = vpack.c.b16 %v1430, %v1423
    %v1858 = vpack.c.b16 %v1431, %v1424
    %v1859 = vpack.c.b16 %v1432, %v1425
    %v1860 = vpack.c.b16 %v1433, %v1426
    %v1861 = vpack.c.b16 %v1441, %v1434
    %v1862 = vpack.c.b16 %v1442, %v1435
    %v1863 = vpack.c.b16 %v1443, %v1436
    %v1864 = vpack.c.b16 %v1444, %v1437
    %v1865 = vpack.c.b16 %v1445, %v1438
    %v1866 = vpack.c.b16 %v1446, %v1439
    %v1867 = vpack.c.b16 %v1447, %v1440
    %v1868 = vpack.c.b16 %v1455, %v1448
    %v1869 = vpack.c.b16 %v1456, %v1449
    %v1870 = vpack.c.b16 %v1457, %v1450
    %v1871 = vpack.c.b16 %v1458, %v1451
    %v1872 = vpack.c.b16 %v1459, %v1452
    %v1873 = vpack.c.b16 %v1460, %v1453
    %v1874 = vpack.c.b16 %v1461, %v1454
    %v1875 = vpack.c.b16 %v1469, %v1462
    %v1876 = vpack.c.b16 %v1470, %v1463
    %v1877 = vpack.c.b16 %v1471, %v1464
    %v1878 = vpack.c.b16 %v1472, %v1465
    %v1879 = vpack.c.b16 %v1473, %v1466
    %v1880 = vpack.c.b16 %v1474, %v1467
    %v1881 = vpack.c.b16 %v1475, %v1468
    %v1882 = vpack.c.b16 %v1483, %v1476
    %v1883 = vpack.c.b16 %v1484, %v1477
    %v1884 = vpack.c.b16 %v1485, %v1478
    %v1885 = vpack.c.b16 %v1486, %v1479
    %v1886 = vpack.c.b16 %v1487, %v1480
    %v1887 = vpack.c.b16 %v1488, %v1481
    %v1888 = vpack.c.b16 %v1489, %v1482
    %v1889 = vpack.c.b16 %v1497, %v1490
    %v1890 = vpack.c.b16 %v1498, %v1491
    %v1891 = vpack.c.b16 %v1499, %v1492
    %v1892 = vpack.c.b16 %v1500, %v1493
    %v1893 = vpack.c.b16 %v1501, %v1494
    %v1894 = vpack.c.b16 %v1502, %v1495
    %v1895 = vpack.c.b16 %v1503, %v1496
    %v1896 = vpack.c.b16 %v1511, %v1504
    %v1897 = vpack.c.b16 %v1512, %v1505
    %v1898 = vpack.c.b16 %v1513, %v1506
    %v1899 = vpack.c.b16 %v1514, %v1507
    %v1900 = vpack.c.b16 %v1515, %v1508
    %v1901 = vpack.c.b16 %v1516, %v1509
    %v1902 = vpack.c.b16 %v1517, %v1510
    %v1903 = vpack.c.b16 %v1525, %v1518
    %v1904 = vpack.c.b16 %v1526, %v1519
    %v1905 = vpack.c.b16 %v1527, %v1520
    %v1906 = vpack.c.b16 %v1528, %v1521
    %v1907 = vpack.c.b16 %v1529, %v1522
    %v1908 = vpack.c.b16 %v1530, %v1523
    %v1909 = vpack.c.b16 %v1531, %v1524
    %v1910 = vpack.c.b16 %v1539, %v1532
    %v1911 = vpack.c.b16 %v1540, %v1533
    %v1912 = vpack.c.b16 %v1541, %v1534
    %v1913 = vpack.c.b16 %v1542, %v1535
    %v1914 = vpack.c.b16 %v1543, %v1536
    %v1915 = vpack.c.b16 %v1544, %v1537
    %v1916 = vpack.c.b16 %v1545, %v1538
    %v1917 = vpack.c.b16 %v1553, %v1546
    %v1918 = vpack.c.b16 %v1554, %v1547
    %v1919 = vpack.c.b16 %v1555, %v1548
    %v1920 = vpack.c.b16 %v1556, %v1549
    %v1921 = vpack.c.b16 %v1557, %v1550
    %v1922 = vpack.c.b16 %v1558, %v1551
    %v1923 = vpack.c.b16 %v1559, %v1552
    %v1924 = vpack.c.b16 %v1567, %v1560
    %v1925 = vpack.c.b16 %v1568, %v1561
    %v1926 = vpack.c.b16 %v1569, %v1562
    %v1927 = vpack.c.b16 %v1570, %v1563
    %v1928 = vpack.c.b16 %v1571, %v1564
    %v1929 = vpack.c.b16 %v1572, %v1565
    %v1930 = vpack.c.b16 %v1573, %v1566
    %v1931 = vpack.c.b16 %v1581, %v1574
    %v1932 = vpack.c.b16 %v1582, %v1575
    %v1933 = vpack.c.b16 %v1583, %v1576
    %v1934 = vpack.c.b16 %v1584, %v1577
    %v1935 = vpack.c.b16 %v1585, %v1578
    %v1936 = vpack.c.b16 %v1586, %v1579
    %v1937 = vpack.c.b16 %v1587, %v1580
    %v1938 = vpack.c.b16 %v1595, %v1588
    %v1939 = vpack.c.b16 %v1596, %v1589
    %v1940 = vpack.c.b16 %v1597, %v1590
    %v1941 = vpack.c.b16 %v1598, %v1591
    %v1942 = vpack.c.b16 %v1599, %v1592
    %v1943 = vpack.c.b16 %v1600, %v1593
    %v1944 = vpack.c.b16 %v1601, %v1594
    %v1945 = vpack.c.b16 %v1609, %v1602
    %v1946 = vpack.c.b16 %v1610, %v1603
    %v1947 = vpack.c.b16 %v1611, %v1604
    %v1948 = vpack.c.b16 %v1612, %v1605
    %v1949 = vpack.c.b16 %v1613, %v1606
    %v1950 = vpack.c.b16 %v1614, %v1607
    %v1951 = vpack.c.b16 %v1615, %v1608
    %v1952 = vpack.c.b16 %v1623, %v1616
    %v1953 = vpack.c.b16 %v1624, %v1617
    %v1954 = vpack.c.b16 %v1625, %v1618
    %v1955 = vpack.c.b16 %v1626, %v1619
    %v1956 = vpack.c.b16 %v1627, %v1620
    %v1957 = vpack.c.b16 %v1628, %v1621
    %v1958 = vpack.c.b16 %v1629, %v1622
    %v1959 = vpack.c.b16 %v1637, %v1630
    %v1960 = vpack.c.b16 %v1638, %v1631
    %v1961 = vpack.c.b16 %v1639, %v1632
    %v1962 = vpack.c.b16 %v1640, %v1633
    %v1963 = vpack.c.b16 %v1641, %v1634
    %v1964 = vpack.c.b16 %v1642, %v1635
    %v1965 = vpack.c.b16 %v1643, %v1636
    %v1966 = vpack.c.b16 %v1651, %v1644
    %v1967 = vpack.c.b16 %v1652, %v1645
    %v1968 = vpack.c.b16 %v1653, %v1646
    %v1969 = vpack.c.b16 %v1654, %v1647
    %v1970 = vpack.c.b16 %v1655, %v1648
    %v1971 = vpack.c.b16 %v1656, %v1649
    %v1972 = vpack.c.b16 %v1657, %v1650
    %v1973 = vpack.c.b16 %v1665, %v1658
    %v1974 = vpack.c.b16 %v1666, %v1659
    %v1975 = vpack.c.b16 %v1667, %v1660
    %v1976 = vpack.c.b16 %v1668, %v1661
    %v1977 = vpack.c.b16 %v1669, %v1662
    %v1978 = vpack.c.b16 %v1670, %v1663
    %v1979 = vpack.c.b16 %v1671, %v1664
    %v1980 = vpack.c.b16 %v1679, %v1672
    %v1981 = vpack.c.b16 %v1680, %v1673
    %v1982 = vpack.c.b16 %v1681, %v1674
    %v1983 = vpack.c.b16 %v1682, %v1675
    %v1984 = vpack.c.b16 %v1683, %v1676
    %v1985 = vpack.c.b16 %v1684, %v1677
    %v1986 = vpack.c.b16 %v1685, %v1678
    %v1987 = vpack.c.b16 %v1693, %v1686
    %v1988 = vpack.c.b16 %v1694, %v1687
    %v1989 = vpack.c.b16 %v1695, %v1688
    %v1990 = vpack.c.b16 %v1696, %v1689
    %v1991 = vpack.c.b16 %v1697, %v1690
    %v1992 = vpack.c.b16 %v1698, %v1691
    %v1993 = vpack.c.b16 %v1699, %v1692
    %v1994 = vpack.c.b16 %v1707, %v1700
    %v1995 = vpack.c.b16 %v1708, %v1701
    %v1996 = vpack.c.b16 %v1709, %v1702
    %v1997 = vpack.c.b16 %v1710, %v1703
    %v1998 = vpack.c.b16 %v1711, %v1704
    %v1999 = vpack.c.b16 %v1712, %v1705
    %v2000 = vpack.c.b16 %v1713, %v1706
    %v2001 = vpack.c.b16 %v1721, %v1714
    %v2002 = vpack.c.b16 %v1722, %v1715
    %v2003 = vpack.c.b16 %v1723, %v1716
    %v2004 = vpack.c.b16 %v1724, %v1717
    %v2005 = vpack.c.b16 %v1725, %v1718
    %v2006 = vpack.c.b16 %v1726, %v1719
    %v2007 = vpack.c.b16 %v1727, %v1720
    %v2008 = vpack.c.b16 %v1735, %v1728
    %v2009 = vpack.c.b16 %v1736, %v1729
    %v2010 = vpack.c.b16 %v1737, %v1730
    %v2011 = vpack.c.b16 %v1738, %v1731
    %v2012 = vpack.c.b16 %v1739, %v1732
    %v2013 = vpack.c.b16 %v1740, %v1733
    %v2014 = vpack.c.b16 %v1741, %v1734
    %v2015 = vpack.c.b16 %v1749, %v1742
    %v2016 = vpack.c.b16 %v1750, %v1743
    %v2017 = vpack.c.b16 %v1751, %v1744
    %v2018 = vpack.c.b16 %v1752, %v1745
    %v2019 = vpack.c.b16 %v1753, %v1746
    %v2020 = vpack.c.b16 %v1754, %v1747
    %v2021 = vpack.c.b16 %v1755, %v1748
    %v2022 = vpack.c.b16 %v1763, %v1756
    %v2023 = vpack.c.b16 %v1764, %v1757
    %v2024 = vpack.c.b16 %v1765, %v1758
    %v2025 = vpack.c.b16 %v1766, %v1759
    %v2026 = vpack.c.b16 %v1767, %v1760
    %v2027 = vpack.c.b16 %v1768, %v1761
    %v2028 = vpack.c.b16 %v1769, %v1762
    %v2029 = vpack.c.b16 %v1777, %v1770
    %v2030 = vpack.c.b16 %v1778, %v1771
    %v2031 = vpack.c.b16 %v1779, %v1772
    %v2032 = vpack.c.b16 %v1780, %v1773
    %v2033 = vpack.c.b16 %v1781, %v1774
    %v2034 = vpack.c.b16 %v1782, %v1775
    %v2035 = vpack.c.b16 %v1783, %v1776
    %v2036 = vpack.c.b16 %v1791, %v1784
    %v2037 = vpack.c.b16 %v1792, %v1785
    %v2038 = vpack.c.b16 %v1793, %v1786
    %v2039 = vpack.c.b16 %v1794, %v1787
    %v2040 = vpack.c.b16 %v1795, %v1788
    %v2041 = vpack.c.b16 %v1796, %v1789
    %v2042 = vpack.c.b16 %v1797, %v1790
    %v2043 = vpack.c.b16 %v1805, %v1798
    %v2044 = vpack.c.b16 %v1806, %v1799
    %v2045 = vpack.c.b16 %v1807, %v1800
    %v2046 = vpack.c.b16 %v1808, %v1801
    %v2047 = vpack.c.b16 %v1809, %v1802
    %v2048 = vpack.c.b16 %v1810, %v1803
    %v2049 = vpack.c.b16 %v1811, %v1804
    %v2050 = vpack.c.b16 %v1819, %v1812
    %v2051 = vpack.c.b16 %v1820, %v1813
    %v2052 = vpack.c.b16 %v1821, %v1814
    %v2053 = vpack.c.b16 %v1822, %v1815
    %v2054 = vpack.c.b16 %v1823, %v1816
    %v2055 = vpack.c.b16 %v1824, %v1817
    %v2056 = vpack.c.b16 %v1825, %v1818
    %v2057 = vpack.c.b16 %v1833, %v1826
    %v2058 = vpack.c.b16 %v1834, %v1827
    %v2059 = vpack.c.b16 %v1835, %v1828
    %v2060 = vpack.c.b16 %v1836, %v1829
    %v2061 = vpack.c.b16 %v1837, %v1830
    %v2062 = vpack.c.b16 %v1838, %v1831
    %v2063 = vpack.c.b16 %v1839, %v1832
    %2288 = vmatpush.bf16.msra.mxu0 %v1889
    %2289 = vmatpush.bf16.msra.mxu0 %v1882
    %2290 = vmatpush.bf16.msra.mxu0 %v1875
    %2291 = vmatpush.bf16.msra.mxu0 %v1868
    %2292 = vmatpush.bf16.msra.mxu0 %v1861
    %2293 = vmatpush.bf16.msra.mxu0 %v1854
    %2294 = vmatpush.bf16.msra.mxu0 %v1847
    %2295 = vmatpush.bf16.msra.mxu0 %v1840
    %2296 = vmatmul.bf16.gmra.mxu0 %v860
    %v2297 = vpop.f32.mrf.mxu0
    %v2298 = vadd.f32 %v1122, %v2297
    %v2299 = vpop.f32.mrf.mxu0
    %2300 = vdwg.mxu0
    %2301 = vmatpush.bf16.msra.mxu0 %v1945
    %2302 = vmatpush.bf16.msra.mxu0 %v1938
    %2303 = vmatpush.bf16.msra.mxu0 %v1931
    %2304 = vmatpush.bf16.msra.mxu0 %v1924
    %2305 = vmatpush.bf16.msra.mxu0 %v1917
    %2306 = vmatpush.bf16.msra.mxu0 %v1910
    %2307 = vmatpush.bf16.msra.mxu0 %v1903
    %2308 = vmatpush.bf16.msra.mxu0 %v1896
    %2309 = vmatmul.bf16.gmra.mxu0 %v861
    %v2310 = vpop.f32.mrf.mxu0
    %v2311 = vadd.f32 %v2298, %v2310
    %v2312 = vpop.f32.mrf.mxu0
    %2313 = vdwg.mxu0
    %2314 = vmatpush.bf16.msra.mxu0 %v2001
    %2315 = vmatpush.bf16.msra.mxu0 %v1994
    %2316 = vmatpush.bf16.msra.mxu0 %v1987
    %2317 = vmatpush.bf16.msra.mxu0 %v1980
    %2318 = vmatpush.bf16.msra.mxu0 %v1973
    %2319 = vmatpush.bf16.msra.mxu0 %v1966
    %2320 = vmatpush.bf16.msra.mxu0 %v1959
    %2321 = vmatpush.bf16.msra.mxu0 %v1952
    %2322 = vmatmul.bf16.gmra.mxu0 %v862
    %v2323 = vpop.f32.mrf.mxu0
    %v2324 = vadd.f32 %v2311, %v2323
    %v2325 = vpop.f32.mrf.mxu0
    %2326 = vdwg.mxu0
    %2327 = vmatpush.bf16.msra.mxu0 %v2057
    %2328 = vmatpush.bf16.msra.mxu0 %v2050
    %2329 = vmatpush.bf16.msra.mxu0 %v2043
    %2330 = vmatpush.bf16.msra.mxu0 %v2036
    %2331 = vmatpush.bf16.msra.mxu0 %v2029
    %2332 = vmatpush.bf16.msra.mxu0 %v2022
    %2333 = vmatpush.bf16.msra.mxu0 %v2015
    %2334 = vmatpush.bf16.msra.mxu0 %v2008
    %2335 = vmatmul.bf16.gmra.mxu0 %v863
    %v2336 = vpop.f32.mrf.mxu0
    %v2337 = vadd.f32 %v2324, %v2336
    %v2338 = vpop.f32.mrf.mxu0
    %2339 = vdwg.mxu0
    %2340 = vmatpush.bf16.msra.mxu0 %v1890
    %2341 = vmatpush.bf16.msra.mxu0 %v1883
    %2342 = vmatpush.bf16.msra.mxu0 %v1876
    %2343 = vmatpush.bf16.msra.mxu0 %v1869
    %2344 = vmatpush.bf16.msra.mxu0 %v1862
    %2345 = vmatpush.bf16.msra.mxu0 %v1855
    %2346 = vmatpush.bf16.msra.mxu0 %v1848
    %2347 = vmatpush.bf16.msra.mxu0 %v1841
    %2348 = vmatmul.bf16.gmra.mxu0 %v860
    %v2349 = vpop.f32.mrf.mxu0
    %v2350 = vadd.f32 %v1123, %v2349
    %v2351 = vpop.f32.mrf.mxu0
    %2352 = vdwg.mxu0
    %2353 = vmatpush.bf16.msra.mxu0 %v1946
    %2354 = vmatpush.bf16.msra.mxu0 %v1939
    %2355 = vmatpush.bf16.msra.mxu0 %v1932
    %2356 = vmatpush.bf16.msra.mxu0 %v1925
    %2357 = vmatpush.bf16.msra.mxu0 %v1918
    %2358 = vmatpush.bf16.msra.mxu0 %v1911
    %2359 = vmatpush.bf16.msra.mxu0 %v1904
    %2360 = vmatpush.bf16.msra.mxu0 %v1897
    %2361 = vmatmul.bf16.gmra.mxu0 %v861
    %v2362 = vpop.f32.mrf.mxu0
    %v2363 = vadd.f32 %v2350, %v2362
    %v2364 = vpop.f32.mrf.mxu0
    %2365 = vdwg.mxu0
    %2366 = vmatpush.bf16.msra.mxu0 %v2002
    %2367 = vmatpush.bf16.msra.mxu0 %v1995
    %2368 = vmatpush.bf16.msra.mxu0 %v1988
    %2369 = vmatpush.bf16.msra.mxu0 %v1981
    %2370 = vmatpush.bf16.msra.mxu0 %v1974
    %2371 = vmatpush.bf16.msra.mxu0 %v1967
    %2372 = vmatpush.bf16.msra.mxu0 %v1960
    %2373 = vmatpush.bf16.msra.mxu0 %v1953
    %2374 = vmatmul.bf16.gmra.mxu0 %v862
    %v2375 = vpop.f32.mrf.mxu0
    %v2376 = vadd.f32 %v2363, %v2375
    %v2377 = vpop.f32.mrf.mxu0
    %2378 = vdwg.mxu0
    %2379 = vmatpush.bf16.msra.mxu0 %v2058
    %2380 = vmatpush.bf16.msra.mxu0 %v2051
    %2381 = vmatpush.bf16.msra.mxu0 %v2044
    %2382 = vmatpush.bf16.msra.mxu0 %v2037
    %2383 = vmatpush.bf16.msra.mxu0 %v2030
    %2384 = vmatpush.bf16.msra.mxu0 %v2023
    %2385 = vmatpush.bf16.msra.mxu0 %v2016
    %2386 = vmatpush.bf16.msra.mxu0 %v2009
    %2387 = vmatmul.bf16.gmra.mxu0 %v863
    %v2388 = vpop.f32.mrf.mxu0
    %v2389 = vadd.f32 %v2376, %v2388
    %v2390 = vpop.f32.mrf.mxu0
    %2391 = vdwg.mxu0
    %2392 = vmatpush.bf16.msra.mxu0 %v1891
    %2393 = vmatpush.bf16.msra.mxu0 %v1884
    %2394 = vmatpush.bf16.msra.mxu0 %v1877
    %2395 = vmatpush.bf16.msra.mxu0 %v1870
    %2396 = vmatpush.bf16.msra.mxu0 %v1863
    %2397 = vmatpush.bf16.msra.mxu0 %v1856
    %2398 = vmatpush.bf16.msra.mxu0 %v1849
    %2399 = vmatpush.bf16.msra.mxu0 %v1842
    %2400 = vmatmul.bf16.gmra.mxu0 %v860
    %v2401 = vpop.f32.mrf.mxu0
    %v2402 = vadd.f32 %v1124, %v2401
    %v2403 = vpop.f32.mrf.mxu0
    %2404 = vdwg.mxu0
    %2405 = vmatpush.bf16.msra.mxu0 %v1947
    %2406 = vmatpush.bf16.msra.mxu0 %v1940
    %2407 = vmatpush.bf16.msra.mxu0 %v1933
    %2408 = vmatpush.bf16.msra.mxu0 %v1926
    %2409 = vmatpush.bf16.msra.mxu0 %v1919
    %2410 = vmatpush.bf16.msra.mxu0 %v1912
    %2411 = vmatpush.bf16.msra.mxu0 %v1905
    %2412 = vmatpush.bf16.msra.mxu0 %v1898
    %2413 = vmatmul.bf16.gmra.mxu0 %v861
    %v2414 = vpop.f32.mrf.mxu0
    %v2415 = vadd.f32 %v2402, %v2414
    %v2416 = vpop.f32.mrf.mxu0
    %2417 = vdwg.mxu0
    %2418 = vmatpush.bf16.msra.mxu0 %v2003
    %2419 = vmatpush.bf16.msra.mxu0 %v1996
    %2420 = vmatpush.bf16.msra.mxu0 %v1989
    %2421 = vmatpush.bf16.msra.mxu0 %v1982
    %2422 = vmatpush.bf16.msra.mxu0 %v1975
    %2423 = vmatpush.bf16.msra.mxu0 %v1968
    %2424 = vmatpush.bf16.msra.mxu0 %v1961
    %2425 = vmatpush.bf16.msra.mxu0 %v1954
    %2426 = vmatmul.bf16.gmra.mxu0 %v862
    %v2427 = vpop.f32.mrf.mxu0
    %v2428 = vadd.f32 %v2415, %v2427
    %v2429 = vpop.f32.mrf.mxu0
    %2430 = vdwg.mxu0
    %2431 = vmatpush.bf16.msra.mxu0 %v2059
    %2432 = vmatpush.bf16.msra.mxu0 %v2052
    %2433 = vmatpush.bf16.msra.mxu0 %v2045
    %2434 = vmatpush.bf16.msra.mxu0 %v2038
    %2435 = vmatpush.bf16.msra.mxu0 %v2031
    %2436 = vmatpush.bf16.msra.mxu0 %v2024
    %2437 = vmatpush.bf16.msra.mxu0 %v2017
    %2438 = vmatpush.bf16.msra.mxu0 %v2010
    %2439 = vmatmul.bf16.gmra.mxu0 %v863
    %v2440 = vpop.f32.mrf.mxu0
    %v2441 = vadd.f32 %v2428, %v2440
    %v2442 = vpop.f32.mrf.mxu0
    %2443 = vdwg.mxu0
    %2444 = vmatpush.bf16.msra.mxu0 %v1892
    %2445 = vmatpush.bf16.msra.mxu0 %v1885
    %2446 = vmatpush.bf16.msra.mxu0 %v1878
    %2447 = vmatpush.bf16.msra.mxu0 %v1871
    %2448 = vmatpush.bf16.msra.mxu0 %v1864
    %2449 = vmatpush.bf16.msra.mxu0 %v1857
    %2450 = vmatpush.bf16.msra.mxu0 %v1850
    %2451 = vmatpush.bf16.msra.mxu0 %v1843
    %2452 = vmatmul.bf16.gmra.mxu0 %v860
    %v2453 = vpop.f32.mrf.mxu0
    %v2454 = vadd.f32 %v1125, %v2453
    %v2455 = vpop.f32.mrf.mxu0
    %2456 = vdwg.mxu0
    %2457 = vmatpush.bf16.msra.mxu0 %v1948
    %2458 = vmatpush.bf16.msra.mxu0 %v1941
    %2459 = vmatpush.bf16.msra.mxu0 %v1934
    %2460 = vmatpush.bf16.msra.mxu0 %v1927
    %2461 = vmatpush.bf16.msra.mxu0 %v1920
    %2462 = vmatpush.bf16.msra.mxu0 %v1913
    %2463 = vmatpush.bf16.msra.mxu0 %v1906
    %2464 = vmatpush.bf16.msra.mxu0 %v1899
    %2465 = vmatmul.bf16.gmra.mxu0 %v861
    %v2466 = vpop.f32.mrf.mxu0
    %v2467 = vadd.f32 %v2454, %v2466
    %v2468 = vpop.f32.mrf.mxu0
    %2469 = vdwg.mxu0
    %2470 = vmatpush.bf16.msra.mxu0 %v2004
    %2471 = vmatpush.bf16.msra.mxu0 %v1997
    %2472 = vmatpush.bf16.msra.mxu0 %v1990
    %2473 = vmatpush.bf16.msra.mxu0 %v1983
    %2474 = vmatpush.bf16.msra.mxu0 %v1976
    %2475 = vmatpush.bf16.msra.mxu0 %v1969
    %2476 = vmatpush.bf16.msra.mxu0 %v1962
    %2477 = vmatpush.bf16.msra.mxu0 %v1955
    %2478 = vmatmul.bf16.gmra.mxu0 %v862
    %v2479 = vpop.f32.mrf.mxu0
    %v2480 = vadd.f32 %v2467, %v2479
    %v2481 = vpop.f32.mrf.mxu0
    %2482 = vdwg.mxu0
    %2483 = vmatpush.bf16.msra.mxu0 %v2060
    %2484 = vmatpush.bf16.msra.mxu0 %v2053
    %2485 = vmatpush.bf16.msra.mxu0 %v2046
    %2486 = vmatpush.bf16.msra.mxu0 %v2039
    %2487 = vmatpush.bf16.msra.mxu0 %v2032
    %2488 = vmatpush.bf16.msra.mxu0 %v2025
    %2489 = vmatpush.bf16.msra.mxu0 %v2018
    %2490 = vmatpush.bf16.msra.mxu0 %v2011
    %2491 = vmatmul.bf16.gmra.mxu0 %v863
    %v2492 = vpop.f32.mrf.mxu0
    %v2493 = vadd.f32 %v2480, %v2492
    %v2494 = vpop.f32.mrf.mxu0
    %2495 = vdwg.mxu0
    %2496 = vmatpush.bf16.msra.mxu0 %v1893
    %2497 = vmatpush.bf16.msra.mxu0 %v1886
    %2498 = vmatpush.bf16.msra.mxu0 %v1879
    %2499 = vmatpush.bf16.msra.mxu0 %v1872
    %2500 = vmatpush.bf16.msra.mxu0 %v1865
    %2501 = vmatpush.bf16.msra.mxu0 %v1858
    %2502 = vmatpush.bf16.msra.mxu0 %v1851
    %2503 = vmatpush.bf16.msra.mxu0 %v1844
    %2504 = vmatmul.bf16.gmra.mxu0 %v860
    %v2505 = vpop.f32.mrf.mxu0
    %v2506 = vadd.f32 %v1126, %v2505
    %v2507 = vpop.f32.mrf.mxu0
    %2508 = vdwg.mxu0
    %2509 = vmatpush.bf16.msra.mxu0 %v1949
    %2510 = vmatpush.bf16.msra.mxu0 %v1942
    %2511 = vmatpush.bf16.msra.mxu0 %v1935
    %2512 = vmatpush.bf16.msra.mxu0 %v1928
    %2513 = vmatpush.bf16.msra.mxu0 %v1921
    %2514 = vmatpush.bf16.msra.mxu0 %v1914
    %2515 = vmatpush.bf16.msra.mxu0 %v1907
    %2516 = vmatpush.bf16.msra.mxu0 %v1900
    %2517 = vmatmul.bf16.gmra.mxu0 %v861
    %v2518 = vpop.f32.mrf.mxu0
    %v2519 = vadd.f32 %v2506, %v2518
    %v2520 = vpop.f32.mrf.mxu0
    %2521 = vdwg.mxu0
    %2522 = vmatpush.bf16.msra.mxu0 %v2005
    %2523 = vmatpush.bf16.msra.mxu0 %v1998
    %2524 = vmatpush.bf16.msra.mxu0 %v1991
    %2525 = vmatpush.bf16.msra.mxu0 %v1984
    %2526 = vmatpush.bf16.msra.mxu0 %v1977
    %2527 = vmatpush.bf16.msra.mxu0 %v1970
    %2528 = vmatpush.bf16.msra.mxu0 %v1963
    %2529 = vmatpush.bf16.msra.mxu0 %v1956
    %2530 = vmatmul.bf16.gmra.mxu0 %v862
    %v2531 = vpop.f32.mrf.mxu0
    %v2532 = vadd.f32 %v2519, %v2531
    %v2533 = vpop.f32.mrf.mxu0
    %2534 = vdwg.mxu0
    %2535 = vmatpush.bf16.msra.mxu0 %v2061
    %2536 = vmatpush.bf16.msra.mxu0 %v2054
    %2537 = vmatpush.bf16.msra.mxu0 %v2047
    %2538 = vmatpush.bf16.msra.mxu0 %v2040
    %2539 = vmatpush.bf16.msra.mxu0 %v2033
    %2540 = vmatpush.bf16.msra.mxu0 %v2026
    %2541 = vmatpush.bf16.msra.mxu0 %v2019
    %2542 = vmatpush.bf16.msra.mxu0 %v2012
    %2543 = vmatmul.bf16.gmra.mxu0 %v863
    %v2544 = vpop.f32.mrf.mxu0
    %v2545 = vadd.f32 %v2532, %v2544
    %v2546 = vpop.f32.mrf.mxu0
    %2547 = vdwg.mxu0
    %2548 = vmatpush.bf16.msra.mxu0 %v1894
    %2549 = vmatpush.bf16.msra.mxu0 %v1887
    %2550 = vmatpush.bf16.msra.mxu0 %v1880
    %2551 = vmatpush.bf16.msra.mxu0 %v1873
    %2552 = vmatpush.bf16.msra.mxu0 %v1866
    %2553 = vmatpush.bf16.msra.mxu0 %v1859
    %2554 = vmatpush.bf16.msra.mxu0 %v1852
    %2555 = vmatpush.bf16.msra.mxu0 %v1845
    %2556 = vmatmul.bf16.gmra.mxu0 %v860
    %v2557 = vpop.f32.mrf.mxu0
    %v2558 = vadd.f32 %v1127, %v2557
    %v2559 = vpop.f32.mrf.mxu0
    %2560 = vdwg.mxu0
    %2561 = vmatpush.bf16.msra.mxu0 %v1950
    %2562 = vmatpush.bf16.msra.mxu0 %v1943
    %2563 = vmatpush.bf16.msra.mxu0 %v1936
    %2564 = vmatpush.bf16.msra.mxu0 %v1929
    %2565 = vmatpush.bf16.msra.mxu0 %v1922
    %2566 = vmatpush.bf16.msra.mxu0 %v1915
    %2567 = vmatpush.bf16.msra.mxu0 %v1908
    %2568 = vmatpush.bf16.msra.mxu0 %v1901
    %2569 = vmatmul.bf16.gmra.mxu0 %v861
    %v2570 = vpop.f32.mrf.mxu0
    %v2571 = vadd.f32 %v2558, %v2570
    %v2572 = vpop.f32.mrf.mxu0
    %2573 = vdwg.mxu0
    %2574 = vmatpush.bf16.msra.mxu0 %v2006
    %2575 = vmatpush.bf16.msra.mxu0 %v1999
    %2576 = vmatpush.bf16.msra.mxu0 %v1992
    %2577 = vmatpush.bf16.msra.mxu0 %v1985
    %2578 = vmatpush.bf16.msra.mxu0 %v1978
    %2579 = vmatpush.bf16.msra.mxu0 %v1971
    %2580 = vmatpush.bf16.msra.mxu0 %v1964
    %2581 = vmatpush.bf16.msra.mxu0 %v1957
    %2582 = vmatmul.bf16.gmra.mxu0 %v862
    %v2583 = vpop.f32.mrf.mxu0
    %v2584 = vadd.f32 %v2571, %v2583
    %v2585 = vpop.f32.mrf.mxu0
    %2586 = vdwg.mxu0
    %2587 = vmatpush.bf16.msra.mxu0 %v2062
    %2588 = vmatpush.bf16.msra.mxu0 %v2055
    %2589 = vmatpush.bf16.msra.mxu0 %v2048
    %2590 = vmatpush.bf16.msra.mxu0 %v2041
    %2591 = vmatpush.bf16.msra.mxu0 %v2034
    %2592 = vmatpush.bf16.msra.mxu0 %v2027
    %2593 = vmatpush.bf16.msra.mxu0 %v2020
    %2594 = vmatpush.bf16.msra.mxu0 %v2013
    %2595 = vmatmul.bf16.gmra.mxu0 %v863
    %v2596 = vpop.f32.mrf.mxu0
    %v2597 = vadd.f32 %v2584, %v2596
    %v2598 = vpop.f32.mrf.mxu0
    %2599 = vdwg.mxu0
    %2600 = vmatpush.bf16.msra.mxu0 %v1895
    %2601 = vmatpush.bf16.msra.mxu0 %v1888
    %2602 = vmatpush.bf16.msra.mxu0 %v1881
    %2603 = vmatpush.bf16.msra.mxu0 %v1874
    %2604 = vmatpush.bf16.msra.mxu0 %v1867
    %2605 = vmatpush.bf16.msra.mxu0 %v1860
    %2606 = vmatpush.bf16.msra.mxu0 %v1853
    %2607 = vmatpush.bf16.msra.mxu0 %v1846
    %2608 = vmatmul.bf16.gmra.mxu0 %v860
    %v2609 = vpop.f32.mrf.mxu0
    %v2610 = vadd.f32 %v1128, %v2609
    %v2611 = vpop.f32.mrf.mxu0
    %2612 = vdwg.mxu0
    %2613 = vmatpush.bf16.msra.mxu0 %v1951
    %2614 = vmatpush.bf16.msra.mxu0 %v1944
    %2615 = vmatpush.bf16.msra.mxu0 %v1937
    %2616 = vmatpush.bf16.msra.mxu0 %v1930
    %2617 = vmatpush.bf16.msra.mxu0 %v1923
    %2618 = vmatpush.bf16.msra.mxu0 %v1916
    %2619 = vmatpush.bf16.msra.mxu0 %v1909
    %2620 = vmatpush.bf16.msra.mxu0 %v1902
    %2621 = vmatmul.bf16.gmra.mxu0 %v861
    %v2622 = vpop.f32.mrf.mxu0
    %v2623 = vadd.f32 %v2610, %v2622
    %v2624 = vpop.f32.mrf.mxu0
    %2625 = vdwg.mxu0
    %2626 = vmatpush.bf16.msra.mxu0 %v2007
    %2627 = vmatpush.bf16.msra.mxu0 %v2000
    %2628 = vmatpush.bf16.msra.mxu0 %v1993
    %2629 = vmatpush.bf16.msra.mxu0 %v1986
    %2630 = vmatpush.bf16.msra.mxu0 %v1979
    %2631 = vmatpush.bf16.msra.mxu0 %v1972
    %2632 = vmatpush.bf16.msra.mxu0 %v1965
    %2633 = vmatpush.bf16.msra.mxu0 %v1958
    %2634 = vmatmul.bf16.gmra.mxu0 %v862
    %v2635 = vpop.f32.mrf.mxu0
    %v2636 = vadd.f32 %v2623, %v2635
    %v2637 = vpop.f32.mrf.mxu0
    %2638 = vdwg.mxu0
    %2639 = vmatpush.bf16.msra.mxu0 %v2063
    %2640 = vmatpush.bf16.msra.mxu0 %v2056
    %2641 = vmatpush.bf16.msra.mxu0 %v2049
    %2642 = vmatpush.bf16.msra.mxu0 %v2042
    %2643 = vmatpush.bf16.msra.mxu0 %v2035
    %2644 = vmatpush.bf16.msra.mxu0 %v2028
    %2645 = vmatpush.bf16.msra.mxu0 %v2021
    %2646 = vmatpush.bf16.msra.mxu0 %v2014
    %2647 = vmatmul.bf16.gmra.mxu0 %v863
    %v2648 = vpop.f32.mrf.mxu0
    %v2649 = vadd.f32 %v2636, %v2648
    %v2650 = vpop.f32.mrf.mxu0
    %2651 = vdwg.mxu0
    %v2652 = vxor.u32 %v2337, 2147483648
    %v2653 = vxor.u32 %v2389, 2147483648
    %v2654 = vxor.u32 %v2441, 2147483648
    %v2655 = vxor.u32 %v2493, 2147483648
    %v2656 = vxor.u32 %v2545, 2147483648
    %v2657 = vxor.u32 %v2597, 2147483648
    %v2658 = vxor.u32 %v2649, 2147483648
    %v2659 = vmul.f32 %v2652, 1.442695
    %v2660 = vpow.pop %v2659
    %v2661 = vmul.f32 %v2653, 1.442695
    %v2662 = vpow.pop %v2661
    %v2663 = vmul.f32 %v2654, 1.442695
    %v2664 = vpow.pop %v2663
    %v2665 = vmul.f32 %v2655, 1.442695
    %v2666 = vpow.pop %v2665
    %v2667 = vmul.f32 %v2656, 1.442695
    %v2668 = vpow.pop %v2667
    %v2669 = vmul.f32 %v2657, 1.442695
    %v2670 = vpow.pop %v2669
    %v2671 = vmul.f32 %v2658, 1.442695
    %v2672 = vpow.pop %v2671
    %v2673 = vadd.f32 %v2660, 1.0
    %v2674 = vadd.f32 %v2662, 1.0
    %v2675 = vadd.f32 %v2664, 1.0
    %v2676 = vadd.f32 %v2666, 1.0
    %v2677 = vadd.f32 %v2668, 1.0
    %v2678 = vadd.f32 %v2670, 1.0
    %v2679 = vadd.f32 %v2672, 1.0
    %v2680 = vrcp.pop %v2673
    %v2681 = vmul.f32 %v2673, %v2680
    %v2682 = vsub.f32 1.0, %v2681
    %v2683 = vmul.f32 %v2680, %v2682
    %v2684 = vadd.f32 %v2680, %v2683
    %vm2685 = vweird.f32 %v2673
    %vm2686 = vweird.f32 %v2680
    %vm2687 = vmor %vm2685, %vm2686
    %v2688 = vsel %vm2687, %v2680, %v2684
    %v2689 = vand.u32 2147483647, %v2673
    %vm2690 = vcmp.eq.f32.partialorder %v2689, 8.507059e+37
    %v2691 = vand.u32 %v2673, 2147483648
    %v2692 = vor.u32 1.1754944e-38, %v2691
    %v2693 = vsel %vm2690, %v2692, %v2688
    %v2694 = vmul.f32 1.0, %v2693
    %v2695 = vrcp.pop %v2674
    %v2696 = vmul.f32 %v2674, %v2695
    %v2697 = vsub.f32 1.0, %v2696
    %v2698 = vmul.f32 %v2695, %v2697
    %v2699 = vadd.f32 %v2695, %v2698
    %vm2700 = vweird.f32 %v2674
    %vm2701 = vweird.f32 %v2695
    %vm2702 = vmor %vm2700, %vm2701
    %v2703 = vsel %vm2702, %v2695, %v2699
    %v2704 = vand.u32 2147483647, %v2674
    %vm2705 = vcmp.eq.f32.partialorder %v2704, 8.507059e+37
    %v2706 = vand.u32 %v2674, 2147483648
    %v2707 = vor.u32 1.1754944e-38, %v2706
    %v2708 = vsel %vm2705, %v2707, %v2703
    %v2709 = vmul.f32 1.0, %v2708
    %v2710 = vrcp.pop %v2675
    %v2711 = vmul.f32 %v2675, %v2710
    %v2712 = vsub.f32 1.0, %v2711
    %v2713 = vmul.f32 %v2710, %v2712
    %v2714 = vadd.f32 %v2710, %v2713
    %vm2715 = vweird.f32 %v2675
    %vm2716 = vweird.f32 %v2710
    %vm2717 = vmor %vm2715, %vm2716
    %v2718 = vsel %vm2717, %v2710, %v2714
    %v2719 = vand.u32 2147483647, %v2675
    %vm2720 = vcmp.eq.f32.partialorder %v2719, 8.507059e+37
    %v2721 = vand.u32 %v2675, 2147483648
    %v2722 = vor.u32 1.1754944e-38, %v2721
    %v2723 = vsel %vm2720, %v2722, %v2718
    %v2724 = vmul.f32 1.0, %v2723
    %v2725 = vrcp.pop %v2676
    %v2726 = vmul.f32 %v2676, %v2725
    %v2727 = vsub.f32 1.0, %v2726
    %v2728 = vmul.f32 %v2725, %v2727
    %v2729 = vadd.f32 %v2725, %v2728
    %vm2730 = vweird.f32 %v2676
    %vm2731 = vweird.f32 %v2725
    %vm2732 = vmor %vm2730, %vm2731
    %v2733 = vsel %vm2732, %v2725, %v2729
    %v2734 = vand.u32 2147483647, %v2676
    %vm2735 = vcmp.eq.f32.partialorder %v2734, 8.507059e+37
    %v2736 = vand.u32 %v2676, 2147483648
    %v2737 = vor.u32 1.1754944e-38, %v2736
    %v2738 = vsel %vm2735, %v2737, %v2733
    %v2739 = vmul.f32 1.0, %v2738
    %v2740 = vrcp.pop %v2677
    %v2741 = vmul.f32 %v2677, %v2740
    %v2742 = vsub.f32 1.0, %v2741
    %v2743 = vmul.f32 %v2740, %v2742
    %v2744 = vadd.f32 %v2740, %v2743
    %vm2745 = vweird.f32 %v2677
    %vm2746 = vweird.f32 %v2740
    %vm2747 = vmor %vm2745, %vm2746
    %v2748 = vsel %vm2747, %v2740, %v2744
    %v2749 = vand.u32 2147483647, %v2677
    %vm2750 = vcmp.eq.f32.partialorder %v2749, 8.507059e+37
    %v2751 = vand.u32 %v2677, 2147483648
    %v2752 = vor.u32 1.1754944e-38, %v2751
    %v2753 = vsel %vm2750, %v2752, %v2748
    %v2754 = vmul.f32 1.0, %v2753
    %v2755 = vrcp.pop %v2678
    %v2756 = vmul.f32 %v2678, %v2755
    %v2757 = vsub.f32 1.0, %v2756
    %v2758 = vmul.f32 %v2755, %v2757
    %v2759 = vadd.f32 %v2755, %v2758
    %vm2760 = vweird.f32 %v2678
    %vm2761 = vweird.f32 %v2755
    %vm2762 = vmor %vm2760, %vm2761
    %v2763 = vsel %vm2762, %v2755, %v2759
    %v2764 = vand.u32 2147483647, %v2678
    %vm2765 = vcmp.eq.f32.partialorder %v2764, 8.507059e+37
    %v2766 = vand.u32 %v2678, 2147483648
    %v2767 = vor.u32 1.1754944e-38, %v2766
    %v2768 = vsel %vm2765, %v2767, %v2763
    %v2769 = vmul.f32 1.0, %v2768
    %v2770 = vrcp.pop %v2679
    %v2771 = vmul.f32 %v2679, %v2770
    %v2772 = vsub.f32 1.0, %v2771
    %v2773 = vmul.f32 %v2770, %v2772
    %v2774 = vadd.f32 %v2770, %v2773
    %vm2775 = vweird.f32 %v2679
    %vm2776 = vweird.f32 %v2770
    %vm2777 = vmor %vm2775, %vm2776
    %v2778 = vsel %vm2777, %v2770, %v2774
    %v2779 = vand.u32 2147483647, %v2679
    %vm2780 = vcmp.eq.f32.partialorder %v2779, 8.507059e+37
    %v2781 = vand.u32 %v2679, 2147483648
    %v2782 = vor.u32 1.1754944e-38, %v2781
    %v2783 = vsel %vm2780, %v2782, %v2778
    %v2784 = vmul.f32 1.0, %v2783
    %v2785 = vpack.c.bf16 %v2709, %v2694
    %v2786 = vpack.c.bf16 %v2739, %v2724
    %v2787 = vpack.c.bf16 %v2769, %v2754
    %v2788 = vpack.c.bf16 %v2784, %v2784
    %2789 = vst [vmem:[#allocation2] sm:$0xff] %v2785
    %2790 = vst [vmem:[#allocation2 + $0x8] sm:$0xff] %v2786
    %2791 = vst [vmem:[#allocation2 + $0x10] sm:$0xff] %v2787
    %vm2792 = vcmask 125952
    %2793 = vst.msk [vmem:[#allocation2 + $0x18] sm:$0xf] %vm2792, %v2788
    // Predicated region
    $region30: #{tpu_custom_call.1} parent=1 // pred_check
      _
    $region31: #{tpu_custom_call.1} parent=1 // pred_check_branch
      %2795 = sbr.rel (0) target = $region33
    $region32: #{tpu_custom_call.1} parent=1 // pred_region
      %2797 = vsyncadd [#allocation3], 0
      %s2799 = sshll.u32 [#allocation2], 4
      %s2800 = int_to_ptr.vmem [resolvable:$true] %s2799
      %s2801 = sshll.u32 %s7, 4
      %s2802 = int_to_ptr.hbm [resolvable:$true] %s2801
      %2804 = dma.vmem_to_hbm [thread:$0]  %s2800, 448, %s2802, [#allocation3]
    $region33: #{tpu_custom_call.1} parent=1 // pred_fallthru
      _
    // Predicated region
    $region34: #{tpu_custom_call.1} parent=1 // pred_check
      _
    $region35: #{tpu_custom_call.1} parent=1 // pred_check_branch
      %2806 = sbr.rel (0) target = $region37
    $region36: #{tpu_custom_call.1} parent=1 // pred_region
      %2808 = dma.done [#allocation3], 448
    $region37: #{tpu_custom_call.1} parent=1 // pred_fallthru
      _
    %2809 = vsyncpa [#allocation3], 1

</llo_original>
